<compile_context>
chip_gen: v7x
topology: tpu7x:2x2x1
jax: 0.10.0
libtpu: 0.0.40
codegen_flags: <defaults>
</compile_context>

<pallas_src>
import functools
import math

import jax
import jax.numpy as jnp
from jax.experimental import pallas as pl
from jax.experimental.pallas import tpu as pltpu

# ----------------------------- configuration --------------------------------
N_LAYERS = 2
N_EMB = 50          # n_embeddings (vocab)
N_POS = 16          # n_pos_embeddings
D = 32              # embedding_dim
PAD = 0             # padding_idx
H = 4               # n_heads
DH = D // H
FF = 4 * D
VOCAB_PAD = 128     # lane-dense padded vocab for the LM head output


# ------------------------------ in-kernel math -------------------------------

def _layer_norm(x, g, b, eps=1e-5):
    mu = jnp.mean(x, axis=-1, keepdims=True)
    var = jnp.mean((x - mu) ** 2, axis=-1, keepdims=True)
    return (x - mu) * jax.lax.rsqrt(var + eps) * g + b


def _gelu(x):
    # TODO(synk): PyTorch nn.GELU defaults to the exact erf form; tanh approx
    # (differs ~1e-3) is used here since the reference Transformer is unspecified.
    return 0.5 * x * (1.0 + jnp.tanh(
        0.7978845608028654 * (x + 0.044715 * x * x * x)))


# ------------------------------ fused kernel ---------------------------------

def _fused_encoder_kernel(lens_ref,                       # SMEM scalar prefetch [B]
                          x_emb_ref, mask_ref,
                          w_qkv_ref, b_qkv_ref, w_o_ref, b_o_ref,
                          ln1_g_ref, ln1_b_ref,
                          w_ff1_ref, b_ff1_ref, w_ff2_ref, b_ff2_ref,
                          ln2_g_ref, ln2_b_ref,
                          tok_T_ref, w_cls_ref, b_cls_ref,
                          cls_ref, lm_ref,
                          x_scratch,
                          *, batch, seq):
    l = pl.program_id(0)

    @pl.when(l == 0)
    def _():
        x_scratch[...] = x_emb_ref[...]

    x = x_scratch[...]                                     # [B*S, D] f32
    mask = mask_ref[...]                                   # [B*S, B*S] additive

    # ---- multi-head self-attention: all heads & batches, VMEM resident ----
    qkv = jnp.dot(x, w_qkv_ref[0], preferred_element_type=jnp.float32) + b_qkv_ref[0]
    w_o = w_o_ref[0]
    scale = 1.0 / math.sqrt(DH)

    attn = None
    for h in range(H):                                     # static unroll, H=4
        qh = qkv[:, h * DH:(h + 1) * DH]
        kh = qkv[:, D + h * DH: D + (h + 1) * DH]
        vh = qkv[:, 2 * D + h * DH: 2 * D + (h + 1) * DH]
        s = jnp.dot(qh, kh.T, preferred_element_type=jnp.float32) * scale + mask
        s = s - jnp.max(s, axis=-1, keepdims=True)
        p = jnp.exp(s)
        p = p * pl.reciprocal(jnp.sum(p, axis=-1, keepdims=True), approx=True)
        oh = jnp.dot(p, vh, preferred_element_type=jnp.float32)      # [B*S, DH]
        # head merge + output projection fused: accumulate per-head contribution
        contrib = jnp.dot(oh, w_o[h * DH:(h + 1) * DH, :],
                          preferred_element_type=jnp.float32)
        attn = contrib if attn is None else attn + contrib
    attn = attn + b_o_ref[0]

    # post-LayerNorm residual block (normalize_before=False)
    x1 = _layer_norm(x + attn, ln1_g_ref[0], ln1_b_ref[0])

    # feed-forward
    hdn = jnp.dot(x1, w_ff1_ref[0], preferred_element_type=jnp.float32) + b_ff1_ref[0]
    hdn = _gelu(hdn)
    hdn = jnp.dot(hdn, w_ff2_ref[0], preferred_element_type=jnp.float32) + b_ff2_ref[0]
    x2 = _layer_norm(x1 + hdn, ln2_g_ref[0], ln2_b_ref[0])

    x_scratch[...] = x2                                    # stays in VMEM for next layer

    @pl.when(l == pl.num_programs(0) - 1)
    def _():
        # LM head (weight tied to tok embedding), lane-dense (128-wide) output.
        lm_ref[...] = jnp.dot(x2, tok_T_ref[...], preferred_element_type=jnp.float32)

        # CLS head: gather last non-pad token of each sequence via SMEM lengths,
        # then a VPU reduce against w_cls.
        rows = []
        for b in range(batch):                             # static unroll, B=2
            idx = lens_ref[b] - 1
            rows.append(x_scratch[pl.ds(b * seq + idx, 1), :])
        x_last = jnp.concatenate(rows, axis=0)             # [B, D]
        cls_ref[...] = (jnp.sum(x_last * w_cls_ref[...], axis=-1, keepdims=True)
                        + b_cls_ref[...])


# ----------------------------- model (forward) --------------------------------

def model_forward(params, tokens):
    B, S = tokens.shape
    BS = B * S

    # ------ plain-JAX glue: embedding lookup, mask & lengths (trivial cost) ------
    padding_mask = tokens == PAD
    not_pad = (~padding_mask).astype(jnp.int32)
    positions = jnp.minimum(jnp.cumsum(not_pad, axis=-1), N_POS) * not_pad
    x_emb = (params["tok_emb"][tokens] + params["pos_emb"][positions]
             ).reshape(BS, D).astype(jnp.float32)

    lengths = jnp.sum(not_pad, axis=-1).astype(jnp.int32)            # [B]

    # Flattened [B*S, B*S] additive mask: same-batch AND causal AND key-not-pad.
    ids = jnp.arange(BS)
    same_batch = (ids[:, None] // S) == (ids[None, :] // S)
    causal = (ids[:, None] % S) >= (ids[None, :] % S)                # future_mask=True
    key_ok = (~padding_mask).reshape(BS)[None, :]
    allowed = same_batch & causal & key_ok
    attn_mask = jnp.where(allowed, 0.0, -1e9).astype(jnp.float32)

    # Weight-tied LM head matrix, pre-transposed and padded to 128 lanes.
    tok_T_pad = jnp.zeros((D, VOCAB_PAD), jnp.float32)
    tok_T_pad = tok_T_pad.at[:, :N_EMB].set(params["tok_emb"].T)

    kern = functools.partial(_fused_encoder_kernel, batch=B, seq=S)

    grid_spec = pltpu.PrefetchScalarGridSpec(
        num_scalar_prefetch=1,                 # lengths -> SMEM
        grid=(N_LAYERS,),
        in_specs=[
            pl.BlockSpec((BS, D), lambda l, lens: (0, 0)),            # x_emb
            pl.BlockSpec((BS, BS), lambda l, lens: (0, 0)),           # attn_mask
            pl.BlockSpec((1, D, 3 * D), lambda l, lens: (l, 0, 0)),   # w_qkv
            pl.BlockSpec((1, 1, 3 * D), lambda l, lens: (l, 0, 0)),   # b_qkv
            pl.BlockSpec((1, D, D), lambda l, lens: (l, 0, 0)),       # w_o
            pl.BlockSpec((1, 1, D), lambda l, lens: (l, 0, 0)),       # b_o
            pl.BlockSpec((1, 1, D), lambda l, lens: (l, 0, 0)),       # ln1_g
            pl.BlockSpec((1, 1, D), lambda l, lens: (l, 0, 0)),       # ln1_b
            pl.BlockSpec((1, D, FF), lambda l, lens: (l, 0, 0)),      # w_ff1
            pl.BlockSpec((1, 1, FF), lambda l, lens: (l, 0, 0)),      # b_ff1
            pl.BlockSpec((1, FF, D), lambda l, lens: (l, 0, 0)),      # w_ff2
            pl.BlockSpec((1, 1, D), lambda l, lens: (l, 0, 0)),       # b_ff2
            pl.BlockSpec((1, 1, D), lambda l, lens: (l, 0, 0)),       # ln2_g
            pl.BlockSpec((1, 1, D), lambda l, lens: (l, 0, 0)),       # ln2_b
            pl.BlockSpec((D, VOCAB_PAD), lambda l, lens: (0, 0)),     # tok_emb.T padded
            pl.BlockSpec((1, D), lambda l, lens: (0, 0)),             # w_cls
            pl.BlockSpec((1, 1), lambda l, lens: (0, 0)),             # b_cls
        ],
        out_specs=[
            pl.BlockSpec((B, 1), lambda l, lens: (0, 0)),             # cls logits
            pl.BlockSpec((BS, VOCAB_PAD), lambda l, lens: (0, 0)),    # lm logits (padded)
        ],
        scratch_shapes=[pltpu.VMEM((BS, D), jnp.float32)],            # resident activations
    )

    cls_pad, lm_pad = pl.pallas_call(
        kern,
        out_shape=(jax.ShapeDtypeStruct((B, 1), jnp.float32),
                   jax.ShapeDtypeStruct((BS, VOCAB_PAD), jnp.float32)),
        grid_spec=grid_spec,
        compiler_params=pltpu.CompilerParams(
            dimension_semantics=("arbitrary",)),   # sequential layer axis
    )(lengths, x_emb, attn_mask,
      params["w_qkv"], params["b_qkv"], params["w_o"], params["b_o"],
      params["ln1_g"], params["ln1_b"],
      params["w_ff1"], params["b_ff1"], params["w_ff2"], params["b_ff2"],
      params["ln2_g"], params["ln2_b"],
      tok_T_pad, params["w_cls"], params["b_cls"])

    cls_output = cls_pad[:, 0]                                        # [B]
    lm_output = lm_pad[:, :N_EMB].reshape(B, S, N_EMB)                # [B, S, V]
    return cls_output, lm_output


# ------------------------------ parameter init --------------------------------

def init_params(key):
    keys = iter(jax.random.split(key, 8 + N_LAYERS * 8))

    def nrm(shape, scale=0.02):
        return (scale * jax.random.normal(next(keys), shape)).astype(jnp.float32)

    tok = nrm((N_EMB, D)).at[PAD].set(0.0)        # padding_idx row zeroed
    pos = nrm((N_POS + 1, D)).at[0].set(0.0)      # pos-padding row zeroed

    def stack(make):
        return jnp.stack([make() for _ in range(N_LAYERS)], axis=0)

    return dict(
        tok_emb=tok, pos_emb=pos,
        # layer weights are pre-stacked along a leading layer axis
        w_qkv=stack(lambda: nrm((D, 3 * D))),
        b_qkv=jnp.zeros((N_LAYERS, 1, 3 * D), jnp.float32),
        w_o=stack(lambda: nrm((D, D))),
        b_o=jnp.zeros((N_LAYERS, 1, D), jnp.float32),
        ln1_g=jnp.ones((N_LAYERS, 1, D), jnp.float32),
        ln1_b=jnp.zeros((N_LAYERS, 1, D), jnp.float32),
        w_ff1=stack(lambda: nrm((D, FF))),
        b_ff1=jnp.zeros((N_LAYERS, 1, FF), jnp.float32),
        w_ff2=stack(lambda: nrm((FF, D))),
        b_ff2=jnp.zeros((N_LAYERS, 1, D), jnp.float32),
        ln2_g=jnp.ones((N_LAYERS, 1, D), jnp.float32),
        ln2_b=jnp.zeros((N_LAYERS, 1, D), jnp.float32),
        w_cls=nrm((1, D)),
        b_cls=jnp.zeros((1, 1), jnp.float32),
    )


# ----------------------------------- main --------------------------------------

if __name__ == "__main__":
    key = jax.random.PRNGKey(0)
    pkey, dkey = jax.random.split(key)

    params = init_params(pkey)

    B, S = 2, 8
    tokens = jax.random.randint(dkey, (B, S), 1, N_EMB, dtype=jnp.int32)
    # emulate pad_sequence: second sequence padded at the end with padding_idx
    tokens = tokens.at[1, 5:].set(PAD)

    fwd = jax.jit(model_forward)
    cls_out, lm_out = fwd(params, tokens)
    jax.block_until_ready((cls_out, lm_out))

    assert cls_out.shape == (B,)
    assert lm_out.shape == (B, S, N_EMB)
    assert jnp.all(jnp.isfinite(cls_out)) and jnp.all(jnp.isfinite(lm_out))
    print("KERNEL_OK")
</pallas_src>

<mosaic_0001>
module attributes {stable_mosaic.version = 11 : i64} {
  func.func @_fused_encoder_kernel(%arg0: i32, %arg1: memref<2xi32, #tpu.memory_space<smem>>, %arg2: memref<16x32xf32, #tpu.memory_space<vmem>>, %arg3: memref<16x16xf32, #tpu.memory_space<vmem>>, %arg4: memref<1x32x96xf32, #tpu.memory_space<vmem>>, %arg5: memref<1x1x96xf32, #tpu.memory_space<vmem>>, %arg6: memref<1x32x32xf32, #tpu.memory_space<vmem>>, %arg7: memref<1x1x32xf32, #tpu.memory_space<vmem>>, %arg8: memref<1x1x32xf32, #tpu.memory_space<vmem>>, %arg9: memref<1x1x32xf32, #tpu.memory_space<vmem>>, %arg10: memref<1x32x128xf32, #tpu.memory_space<vmem>>, %arg11: memref<1x1x128xf32, #tpu.memory_space<vmem>>, %arg12: memref<1x128x32xf32, #tpu.memory_space<vmem>>, %arg13: memref<1x1x32xf32, #tpu.memory_space<vmem>>, %arg14: memref<1x1x32xf32, #tpu.memory_space<vmem>>, %arg15: memref<1x1x32xf32, #tpu.memory_space<vmem>>, %arg16: memref<32x128xf32, #tpu.memory_space<vmem>>, %arg17: memref<1x32xf32, #tpu.memory_space<vmem>>, %arg18: memref<1x1xf32, #tpu.memory_space<vmem>>, %arg19: memref<2x1xf32, #tpu.memory_space<vmem>>, %arg20: memref<16x128xf32, #tpu.memory_space<vmem>>, %arg21: memref<16x32xf32, #tpu.memory_space<vmem>>) attributes {dimension_semantics = [#tpu.dimension_semantics<arbitrary>], iteration_bounds = array<i64: 2>, scalar_prefetch = 1 : i64, scratch_operands = 1 : i64, tpu.core_type = #tpu.core_type<tc>, window_params = [{pipeline_mode = #tpu.pipeline_mode<synchronous>, transform_indices = @transform_0, window_bounds = array<i64: 16, 32>}, {pipeline_mode = #tpu.pipeline_mode<synchronous>, transform_indices = @transform_1, window_bounds = array<i64: 16, 16>}, {transform_indices = @transform_2, window_bounds = array<i64: 1, 32, 96>}, {transform_indices = @transform_3, window_bounds = array<i64: 1, 1, 96>}, {transform_indices = @transform_4, window_bounds = array<i64: 1, 32, 32>}, {transform_indices = @transform_5, window_bounds = array<i64: 1, 1, 32>}, {transform_indices = @transform_6, window_bounds = array<i64: 1, 1, 32>}, {transform_indices = @transform_7, window_bounds = array<i64: 1, 1, 32>}, {transform_indices = @transform_8, window_bounds = array<i64: 1, 32, 128>}, {transform_indices = @transform_9, window_bounds = array<i64: 1, 1, 128>}, {transform_indices = @transform_10, window_bounds = array<i64: 1, 128, 32>}, {transform_indices = @transform_11, window_bounds = array<i64: 1, 1, 32>}, {transform_indices = @transform_12, window_bounds = array<i64: 1, 1, 32>}, {transform_indices = @transform_13, window_bounds = array<i64: 1, 1, 32>}, {pipeline_mode = #tpu.pipeline_mode<synchronous>, transform_indices = @transform_14, window_bounds = array<i64: 32, 128>}, {pipeline_mode = #tpu.pipeline_mode<synchronous>, transform_indices = @transform_15, window_bounds = array<i64: 1, 32>}, {pipeline_mode = #tpu.pipeline_mode<synchronous>, transform_indices = @transform_16, window_bounds = array<i64: 1, 1>}, {pipeline_mode = #tpu.pipeline_mode<synchronous>, transform_indices = @transform_17, window_bounds = array<i64: 2, 1>}, {pipeline_mode = #tpu.pipeline_mode<synchronous>, transform_indices = @transform_18, window_bounds = array<i64: 16, 128>}]} {
    %c0_i32 = arith.constant 0 : i32
    %0 = arith.cmpi eq, %arg0, %c0_i32 : i32
    %1 = arith.extui %0 : i1 to i32
    %c0_i32_0 = arith.constant 0 : i32
    %2 = arith.cmpi ne, %1, %c0_i32_0 : i32
    scf.if %2 {
      %c0_83 = arith.constant 0 : index
      %c0_84 = arith.constant 0 : index
      %190 = vector.load %arg2[%c0_83, %c0_84] : memref<16x32xf32, #tpu.memory_space<vmem>>, vector<16x32xf32>
      %c0_85 = arith.constant 0 : index
      %c0_86 = arith.constant 0 : index
      %191 = vector.load %arg21[%c0_85, %c0_86] : memref<16x32xf32, #tpu.memory_space<vmem>>, vector<16x32xf32>
      tpu.vector_store %arg21[%c0_85, %c0_86], %190 {strides = array<i32>} : memref<16x32xf32, #tpu.memory_space<vmem>>, vector<16x32xf32>,
    } else {
    }
    %c0 = arith.constant 0 : index
    %c0_1 = arith.constant 0 : index
    %3 = vector.load %arg21[%c0, %c0_1] : memref<16x32xf32, #tpu.memory_space<vmem>>, vector<16x32xf32>
    %c0_2 = arith.constant 0 : index
    %c0_3 = arith.constant 0 : index
    %4 = vector.load %arg3[%c0_2, %c0_3] : memref<16x16xf32, #tpu.memory_space<vmem>>, vector<16x16xf32>
    %c0_4 = arith.constant 0 : index
    %c0_5 = arith.constant 0 : index
    %c0_6 = arith.constant 0 : index
    %5 = vector.load %arg4[%c0_4, %c0_5, %c0_6] : memref<1x32x96xf32, #tpu.memory_space<vmem>>, vector<1x32x96xf32>
    %6 = vector.shape_cast %5 : vector<1x32x96xf32> to vector<32x96xf32>
    %cst = arith.constant dense<0.000000e+00> : vector<16x96xf32>
    %7 = tpu.matmul %3, %6, %cst {dimension_numbers = #tpu.dot_dimension_numbers<[1], [0], [0], [1], [0, 0, 1, 1], [], []>} : vector<16x32xf32>, vector<32x96xf32>, vector<16x96xf32> -> vector<16x96xf32>
    %c0_7 = arith.constant 0 : index
    %c0_8 = arith.constant 0 : index
    %c0_9 = arith.constant 0 : index
    %8 = vector.load %arg5[%c0_7, %c0_8, %c0_9] : memref<1x1x96xf32, #tpu.memory_space<vmem>>, vector<1x1x96xf32>
    %9 = vector.shape_cast %8 : vector<1x1x96xf32> to vector<1x96xf32>
    %10 = vector.broadcast %9 : vector<1x96xf32> to vector<16x96xf32>
    %11 = arith.addf %7, %10 : vector<16x96xf32>
    %c0_10 = arith.constant 0 : index
    %c0_11 = arith.constant 0 : index
    %c0_12 = arith.constant 0 : index
    %12 = vector.load %arg6[%c0_10, %c0_11, %c0_12] : memref<1x32x32xf32, #tpu.memory_space<vmem>>, vector<1x32x32xf32>
    %13 = vector.shape_cast %12 : vector<1x32x32xf32> to vector<32x32xf32>
    %14 = vector.extract_strided_slice %11 {offsets = [0, 0], sizes = [16, 8], strides = [1, 1]} : vector<16x96xf32> to vector<16x8xf32>
    %15 = vector.extract_strided_slice %11 {offsets = [0, 32], sizes = [16, 8], strides = [1, 1]} : vector<16x96xf32> to vector<16x8xf32>
    %16 = vector.extract_strided_slice %11 {offsets = [0, 64], sizes = [16, 8], strides = [1, 1]} : vector<16x96xf32> to vector<16x8xf32>
    %17 = tpu.transpose %15, [1, 0] : vector<16x8xf32> -> vector<8x16xf32>
    %cst_13 = arith.constant dense<0.000000e+00> : vector<16x16xf32>
    %18 = tpu.matmul %14, %17, %cst_13 {dimension_numbers = #tpu.dot_dimension_numbers<[1], [0], [0], [1], [0, 0, 1, 1], [], []>} : vector<16x8xf32>, vector<8x16xf32>, vector<16x16xf32> -> vector<16x16xf32>
    %cst_14 = arith.constant 0.353553385 : f32
    %19 = vector.broadcast %cst_14 : f32 to vector<16x16xf32>
    %20 = arith.mulf %18, %19 : vector<16x16xf32>
    %21 = arith.addf %20, %4 : vector<16x16xf32>
    %cst_15 = arith.constant dense<0xFF800000> : vector<16xf32>
    %22 = vector.multi_reduction <maximumf>, %21, %cst_15 [1] : vector<16x16xf32> to vector<16xf32>
    %23 = vector.shape_cast %22 : vector<16xf32> to vector<16x1xf32>
    %24 = vector.broadcast %23 : vector<16x1xf32> to vector<16x16xf32>
    %25 = arith.subf %21, %24 : vector<16x16xf32>
    %26 = math.exp %25 : vector<16x16xf32>
    %cst_16 = arith.constant dense<0.000000e+00> : vector<16xf32>
    %27 = vector.multi_reduction <add>, %26, %cst_16 [1] : vector<16x16xf32> to vector<16xf32>
    %28 = vector.shape_cast %27 : vector<16xf32> to vector<16x1xf32>
    %29 = tpu.reciprocal %28 {approx = true} : vector<16x1xf32> -> vector<16x1xf32>
    %30 = vector.broadcast %29 : vector<16x1xf32> to vector<16x16xf32>
    %31 = arith.mulf %26, %30 : vector<16x16xf32>
    %cst_17 = arith.constant dense<0.000000e+00> : vector<16x8xf32>
    %32 = tpu.matmul %31, %16, %cst_17 {dimension_numbers = #tpu.dot_dimension_numbers<[1], [0], [0], [1], [0, 0, 1, 1], [], []>} : vector<16x16xf32>, vector<16x8xf32>, vector<16x8xf32> -> vector<16x8xf32>
    %33 = vector.extract_strided_slice %13 {offsets = [0, 0], sizes = [8, 32], strides = [1, 1]} : vector<32x32xf32> to vector<8x32xf32>
    %cst_18 = arith.constant dense<0.000000e+00> : vector<16x32xf32>
    %34 = tpu.matmul %32, %33, %cst_18 {dimension_numbers = #tpu.dot_dimension_numbers<[1], [0], [0], [1], [0, 0, 1, 1], [], []>} : vector<16x8xf32>, vector<8x32xf32>, vector<16x32xf32> -> vector<16x32xf32>
    %35 = vector.extract_strided_slice %11 {offsets = [0, 8], sizes = [16, 8], strides = [1, 1]} : vector<16x96xf32> to vector<16x8xf32>
    %36 = vector.extract_strided_slice %11 {offsets = [0, 40], sizes = [16, 8], strides = [1, 1]} : vector<16x96xf32> to vector<16x8xf32>
    %37 = vector.extract_strided_slice %11 {offsets = [0, 72], sizes = [16, 8], strides = [1, 1]} : vector<16x96xf32> to vector<16x8xf32>
    %38 = tpu.transpose %36, [1, 0] : vector<16x8xf32> -> vector<8x16xf32>
    %cst_19 = arith.constant dense<0.000000e+00> : vector<16x16xf32>
    %39 = tpu.matmul %35, %38, %cst_19 {dimension_numbers = #tpu.dot_dimension_numbers<[1], [0], [0], [1], [0, 0, 1, 1], [], []>} : vector<16x8xf32>, vector<8x16xf32>, vector<16x16xf32> -> vector<16x16xf32>
    %cst_20 = arith.constant 0.353553385 : f32
    %40 = vector.broadcast %cst_20 : f32 to vector<16x16xf32>
    %41 = arith.mulf %39, %40 : vector<16x16xf32>
    %42 = arith.addf %41, %4 : vector<16x16xf32>
    %cst_21 = arith.constant dense<0xFF800000> : vector<16xf32>
    %43 = vector.multi_reduction <maximumf>, %42, %cst_21 [1] : vector<16x16xf32> to vector<16xf32>
    %44 = vector.shape_cast %43 : vector<16xf32> to vector<16x1xf32>
    %45 = vector.broadcast %44 : vector<16x1xf32> to vector<16x16xf32>
    %46 = arith.subf %42, %45 : vector<16x16xf32>
    %47 = math.exp %46 : vector<16x16xf32>
    %cst_22 = arith.constant dense<0.000000e+00> : vector<16xf32>
    %48 = vector.multi_reduction <add>, %47, %cst_22 [1] : vector<16x16xf32> to vector<16xf32>
    %49 = vector.shape_cast %48 : vector<16xf32> to vector<16x1xf32>
    %50 = tpu.reciprocal %49 {approx = true} : vector<16x1xf32> -> vector<16x1xf32>
    %51 = vector.broadcast %50 : vector<16x1xf32> to vector<16x16xf32>
    %52 = arith.mulf %47, %51 : vector<16x16xf32>
    %cst_23 = arith.constant dense<0.000000e+00> : vector<16x8xf32>
    %53 = tpu.matmul %52, %37, %cst_23 {dimension_numbers = #tpu.dot_dimension_numbers<[1], [0], [0], [1], [0, 0, 1, 1], [], []>} : vector<16x16xf32>, vector<16x8xf32>, vector<16x8xf32> -> vector<16x8xf32>
    %54 = vector.extract_strided_slice %13 {offsets = [8, 0], sizes = [8, 32], strides = [1, 1]} : vector<32x32xf32> to vector<8x32xf32>
    %cst_24 = arith.constant dense<0.000000e+00> : vector<16x32xf32>
    %55 = tpu.matmul %53, %54, %cst_24 {dimension_numbers = #tpu.dot_dimension_numbers<[1], [0], [0], [1], [0, 0, 1, 1], [], []>} : vector<16x8xf32>, vector<8x32xf32>, vector<16x32xf32> -> vector<16x32xf32>
    %56 = arith.addf %34, %55 : vector<16x32xf32>
    %57 = vector.extract_strided_slice %11 {offsets = [0, 16], sizes = [16, 8], strides = [1, 1]} : vector<16x96xf32> to vector<16x8xf32>
    %58 = vector.extract_strided_slice %11 {offsets = [0, 48], sizes = [16, 8], strides = [1, 1]} : vector<16x96xf32> to vector<16x8xf32>
    %59 = vector.extract_strided_slice %11 {offsets = [0, 80], sizes = [16, 8], strides = [1, 1]} : vector<16x96xf32> to vector<16x8xf32>
    %60 = tpu.transpose %58, [1, 0] : vector<16x8xf32> -> vector<8x16xf32>
    %cst_25 = arith.constant dense<0.000000e+00> : vector<16x16xf32>
    %61 = tpu.matmul %57, %60, %cst_25 {dimension_numbers = #tpu.dot_dimension_numbers<[1], [0], [0], [1], [0, 0, 1, 1], [], []>} : vector<16x8xf32>, vector<8x16xf32>, vector<16x16xf32> -> vector<16x16xf32>
    %cst_26 = arith.constant 0.353553385 : f32
    %62 = vector.broadcast %cst_26 : f32 to vector<16x16xf32>
    %63 = arith.mulf %61, %62 : vector<16x16xf32>
    %64 = arith.addf %63, %4 : vector<16x16xf32>
    %cst_27 = arith.constant dense<0xFF800000> : vector<16xf32>
    %65 = vector.multi_reduction <maximumf>, %64, %cst_27 [1] : vector<16x16xf32> to vector<16xf32>
    %66 = vector.shape_cast %65 : vector<16xf32> to vector<16x1xf32>
    %67 = vector.broadcast %66 : vector<16x1xf32> to vector<16x16xf32>
    %68 = arith.subf %64, %67 : vector<16x16xf32>
    %69 = math.exp %68 : vector<16x16xf32>
    %cst_28 = arith.constant dense<0.000000e+00> : vector<16xf32>
    %70 = vector.multi_reduction <add>, %69, %cst_28 [1] : vector<16x16xf32> to vector<16xf32>
    %71 = vector.shape_cast %70 : vector<16xf32> to vector<16x1xf32>
    %72 = tpu.reciprocal %71 {approx = true} : vector<16x1xf32> -> vector<16x1xf32>
    %73 = vector.broadcast %72 : vector<16x1xf32> to vector<16x16xf32>
    %74 = arith.mulf %69, %73 : vector<16x16xf32>
    %cst_29 = arith.constant dense<0.000000e+00> : vector<16x8xf32>
    %75 = tpu.matmul %74, %59, %cst_29 {dimension_numbers = #tpu.dot_dimension_numbers<[1], [0], [0], [1], [0, 0, 1, 1], [], []>} : vector<16x16xf32>, vector<16x8xf32>, vector<16x8xf32> -> vector<16x8xf32>
    %76 = vector.extract_strided_slice %13 {offsets = [16, 0], sizes = [8, 32], strides = [1, 1]} : vector<32x32xf32> to vector<8x32xf32>
    %cst_30 = arith.constant dense<0.000000e+00> : vector<16x32xf32>
    %77 = tpu.matmul %75, %76, %cst_30 {dimension_numbers = #tpu.dot_dimension_numbers<[1], [0], [0], [1], [0, 0, 1, 1], [], []>} : vector<16x8xf32>, vector<8x32xf32>, vector<16x32xf32> -> vector<16x32xf32>
    %78 = arith.addf %56, %77 : vector<16x32xf32>
    %79 = vector.extract_strided_slice %11 {offsets = [0, 24], sizes = [16, 8], strides = [1, 1]} : vector<16x96xf32> to vector<16x8xf32>
    %80 = vector.extract_strided_slice %11 {offsets = [0, 56], sizes = [16, 8], strides = [1, 1]} : vector<16x96xf32> to vector<16x8xf32>
    %81 = vector.extract_strided_slice %11 {offsets = [0, 88], sizes = [16, 8], strides = [1, 1]} : vector<16x96xf32> to vector<16x8xf32>
    %82 = tpu.transpose %80, [1, 0] : vector<16x8xf32> -> vector<8x16xf32>
    %cst_31 = arith.constant dense<0.000000e+00> : vector<16x16xf32>
    %83 = tpu.matmul %79, %82, %cst_31 {dimension_numbers = #tpu.dot_dimension_numbers<[1], [0], [0], [1], [0, 0, 1, 1], [], []>} : vector<16x8xf32>, vector<8x16xf32>, vector<16x16xf32> -> vector<16x16xf32>
    %cst_32 = arith.constant 0.353553385 : f32
    %84 = vector.broadcast %cst_32 : f32 to vector<16x16xf32>
    %85 = arith.mulf %83, %84 : vector<16x16xf32>
    %86 = arith.addf %85, %4 : vector<16x16xf32>
    %cst_33 = arith.constant dense<0xFF800000> : vector<16xf32>
    %87 = vector.multi_reduction <maximumf>, %86, %cst_33 [1] : vector<16x16xf32> to vector<16xf32>
    %88 = vector.shape_cast %87 : vector<16xf32> to vector<16x1xf32>
    %89 = vector.broadcast %88 : vector<16x1xf32> to vector<16x16xf32>
    %90 = arith.subf %86, %89 : vector<16x16xf32>
    %91 = math.exp %90 : vector<16x16xf32>
    %cst_34 = arith.constant dense<0.000000e+00> : vector<16xf32>
    %92 = vector.multi_reduction <add>, %91, %cst_34 [1] : vector<16x16xf32> to vector<16xf32>
    %93 = vector.shape_cast %92 : vector<16xf32> to vector<16x1xf32>
    %94 = tpu.reciprocal %93 {approx = true} : vector<16x1xf32> -> vector<16x1xf32>
    %95 = vector.broadcast %94 : vector<16x1xf32> to vector<16x16xf32>
    %96 = arith.mulf %91, %95 : vector<16x16xf32>
    %cst_35 = arith.constant dense<0.000000e+00> : vector<16x8xf32>
    %97 = tpu.matmul %96, %81, %cst_35 {dimension_numbers = #tpu.dot_dimension_numbers<[1], [0], [0], [1], [0, 0, 1, 1], [], []>} : vector<16x16xf32>, vector<16x8xf32>, vector<16x8xf32> -> vector<16x8xf32>
    %98 = vector.extract_strided_slice %13 {offsets = [24, 0], sizes = [8, 32], strides = [1, 1]} : vector<32x32xf32> to vector<8x32xf32>
    %cst_36 = arith.constant dense<0.000000e+00> : vector<16x32xf32>
    %99 = tpu.matmul %97, %98, %cst_36 {dimension_numbers = #tpu.dot_dimension_numbers<[1], [0], [0], [1], [0, 0, 1, 1], [], []>} : vector<16x8xf32>, vector<8x32xf32>, vector<16x32xf32> -> vector<16x32xf32>
    %100 = arith.addf %78, %99 : vector<16x32xf32>
    %c0_37 = arith.constant 0 : index
    %c0_38 = arith.constant 0 : index
    %c0_39 = arith.constant 0 : index
    %101 = vector.load %arg7[%c0_37, %c0_38, %c0_39] : memref<1x1x32xf32, #tpu.memory_space<vmem>>, vector<1x1x32xf32>
    %102 = vector.shape_cast %101 : vector<1x1x32xf32> to vector<1x32xf32>
    %103 = vector.broadcast %102 : vector<1x32xf32> to vector<16x32xf32>
    %104 = arith.addf %100, %103 : vector<16x32xf32>
    %105 = arith.addf %3, %104 : vector<16x32xf32>
    %c0_40 = arith.constant 0 : index
    %c0_41 = arith.constant 0 : index
    %c0_42 = arith.constant 0 : index
    %106 = vector.load %arg8[%c0_40, %c0_41, %c0_42] : memref<1x1x32xf32, #tpu.memory_space<vmem>>, vector<1x1x32xf32>
    %107 = vector.shape_cast %106 : vector<1x1x32xf32> to vector<1x32xf32>
    %c0_43 = arith.constant 0 : index
    %c0_44 = arith.constant 0 : index
    %c0_45 = arith.constant 0 : index
    %108 = vector.load %arg9[%c0_43, %c0_44, %c0_45] : memref<1x1x32xf32, #tpu.memory_space<vmem>>, vector<1x1x32xf32>
    %109 = vector.shape_cast %108 : vector<1x1x32xf32> to vector<1x32xf32>
    %cst_46 = arith.constant dense<0.000000e+00> : vector<16xf32>
    %110 = vector.multi_reduction <add>, %105, %cst_46 [1] : vector<16x32xf32> to vector<16xf32>
    %111 = vector.shape_cast %110 : vector<16xf32> to vector<16x1xf32>
    %cst_47 = arith.constant 3.200000e+01 : f32
    %112 = vector.broadcast %cst_47 : f32 to vector<16x1xf32>
    %113 = arith.divf %111, %112 : vector<16x1xf32>
    %114 = vector.broadcast %113 : vector<16x1xf32> to vector<16x32xf32>
    %115 = arith.subf %105, %114 : vector<16x32xf32>
    %116 = arith.mulf %115, %115 : vector<16x32xf32>
    %cst_48 = arith.constant dense<0.000000e+00> : vector<16xf32>
    %117 = vector.multi_reduction <add>, %116, %cst_48 [1] : vector<16x32xf32> to vector<16xf32>
    %118 = vector.shape_cast %117 : vector<16xf32> to vector<16x1xf32>
    %cst_49 = arith.constant 3.200000e+01 : f32
    %119 = vector.broadcast %cst_49 : f32 to vector<16x1xf32>
    %120 = arith.divf %118, %119 : vector<16x1xf32>
    %121 = vector.broadcast %113 : vector<16x1xf32> to vector<16x32xf32>
    %122 = arith.subf %105, %121 : vector<16x32xf32>
    %cst_50 = arith.constant 9.99999974E-6 : f32
    %123 = vector.broadcast %cst_50 : f32 to vector<16x1xf32>
    %124 = arith.addf %120, %123 : vector<16x1xf32>
    %125 = math.rsqrt %124 : vector<16x1xf32>
    %126 = vector.broadcast %125 : vector<16x1xf32> to vector<16x32xf32>
    %127 = arith.mulf %122, %126 : vector<16x32xf32>
    %128 = vector.broadcast %107 : vector<1x32xf32> to vector<16x32xf32>
    %129 = arith.mulf %127, %128 : vector<16x32xf32>
    %130 = vector.broadcast %109 : vector<1x32xf32> to vector<16x32xf32>
    %131 = arith.addf %129, %130 : vector<16x32xf32>
    %c0_51 = arith.constant 0 : index
    %c0_52 = arith.constant 0 : index
    %c0_53 = arith.constant 0 : index
    %132 = vector.load %arg10[%c0_51, %c0_52, %c0_53] : memref<1x32x128xf32, #tpu.memory_space<vmem>>, vector<1x32x128xf32>
    %133 = vector.shape_cast %132 : vector<1x32x128xf32> to vector<32x128xf32>
    %cst_54 = arith.constant dense<0.000000e+00> : vector<16x128xf32>
    %134 = tpu.matmul %131, %133, %cst_54 {dimension_numbers = #tpu.dot_dimension_numbers<[1], [0], [0], [1], [0, 0, 1, 1], [], []>} : vector<16x32xf32>, vector<32x128xf32>, vector<16x128xf32> -> vector<16x128xf32>
    %c0_55 = arith.constant 0 : index
    %c0_56 = arith.constant 0 : index
    %c0_57 = arith.constant 0 : index
    %135 = vector.load %arg11[%c0_55, %c0_56, %c0_57] : memref<1x1x128xf32, #tpu.memory_space<vmem>>, vector<1x1x128xf32>
    %136 = vector.shape_cast %135 : vector<1x1x128xf32> to vector<1x128xf32>
    %137 = vector.broadcast %136 : vector<1x128xf32> to vector<16x128xf32>
    %138 = arith.addf %134, %137 : vector<16x128xf32>
    %cst_58 = arith.constant 5.000000e-01 : f32
    %139 = vector.broadcast %cst_58 : f32 to vector<16x128xf32>
    %140 = arith.mulf %139, %138 : vector<16x128xf32>
    %cst_59 = arith.constant 4.471500e-02 : f32
    %141 = vector.broadcast %cst_59 : f32 to vector<16x128xf32>
    %142 = arith.mulf %141, %138 : vector<16x128xf32>
    %143 = arith.mulf %142, %138 : vector<16x128xf32>
    %144 = arith.mulf %143, %138 : vector<16x128xf32>
    %145 = arith.addf %138, %144 : vector<16x128xf32>
    %cst_60 = arith.constant 0.797884583 : f32
    %146 = vector.broadcast %cst_60 : f32 to vector<16x128xf32>
    %147 = arith.mulf %146, %145 : vector<16x128xf32>
    %148 = math.tanh %147 : vector<16x128xf32>
    %cst_61 = arith.constant 1.000000e+00 : f32
    %149 = vector.broadcast %cst_61 : f32 to vector<16x128xf32>
    %150 = arith.addf %149, %148 : vector<16x128xf32>
    %151 = arith.mulf %140, %150 : vector<16x128xf32>
    %c0_62 = arith.constant 0 : index
    %c0_63 = arith.constant 0 : index
    %c0_64 = arith.constant 0 : index
    %152 = vector.load %arg12[%c0_62, %c0_63, %c0_64] : memref<1x128x32xf32, #tpu.memory_space<vmem>>, vector<1x128x32xf32>
    %153 = vector.shape_cast %152 : vector<1x128x32xf32> to vector<128x32xf32>
    %cst_65 = arith.constant dense<0.000000e+00> : vector<16x32xf32>
    %154 = tpu.matmul %151, %153, %cst_65 {dimension_numbers = #tpu.dot_dimension_numbers<[1], [0], [0], [1], [0, 0, 1, 1], [], []>} : vector<16x128xf32>, vector<128x32xf32>, vector<16x32xf32> -> vector<16x32xf32>
    %c0_66 = arith.constant 0 : index
    %c0_67 = arith.constant 0 : index
    %c0_68 = arith.constant 0 : index
    %155 = vector.load %arg13[%c0_66, %c0_67, %c0_68] : memref<1x1x32xf32, #tpu.memory_space<vmem>>, vector<1x1x32xf32>
    %156 = vector.shape_cast %155 : vector<1x1x32xf32> to vector<1x32xf32>
    %157 = vector.broadcast %156 : vector<1x32xf32> to vector<16x32xf32>
    %158 = arith.addf %154, %157 : vector<16x32xf32>
    %159 = arith.addf %131, %158 : vector<16x32xf32>
    %c0_69 = arith.constant 0 : index
    %c0_70 = arith.constant 0 : index
    %c0_71 = arith.constant 0 : index
    %160 = vector.load %arg14[%c0_69, %c0_70, %c0_71] : memref<1x1x32xf32, #tpu.memory_space<vmem>>, vector<1x1x32xf32>
    %161 = vector.shape_cast %160 : vector<1x1x32xf32> to vector<1x32xf32>
    %c0_72 = arith.constant 0 : index
    %c0_73 = arith.constant 0 : index
    %c0_74 = arith.constant 0 : index
    %162 = vector.load %arg15[%c0_72, %c0_73, %c0_74] : memref<1x1x32xf32, #tpu.memory_space<vmem>>, vector<1x1x32xf32>
    %163 = vector.shape_cast %162 : vector<1x1x32xf32> to vector<1x32xf32>
    %cst_75 = arith.constant dense<0.000000e+00> : vector<16xf32>
    %164 = vector.multi_reduction <add>, %159, %cst_75 [1] : vector<16x32xf32> to vector<16xf32>
    %165 = vector.shape_cast %164 : vector<16xf32> to vector<16x1xf32>
    %cst_76 = arith.constant 3.200000e+01 : f32
    %166 = vector.broadcast %cst_76 : f32 to vector<16x1xf32>
    %167 = arith.divf %165, %166 : vector<16x1xf32>
    %168 = vector.broadcast %167 : vector<16x1xf32> to vector<16x32xf32>
    %169 = arith.subf %159, %168 : vector<16x32xf32>
    %170 = arith.mulf %169, %169 : vector<16x32xf32>
    %cst_77 = arith.constant dense<0.000000e+00> : vector<16xf32>
    %171 = vector.multi_reduction <add>, %170, %cst_77 [1] : vector<16x32xf32> to vector<16xf32>
    %172 = vector.shape_cast %171 : vector<16xf32> to vector<16x1xf32>
    %cst_78 = arith.constant 3.200000e+01 : f32
    %173 = vector.broadcast %cst_78 : f32 to vector<16x1xf32>
    %174 = arith.divf %172, %173 : vector<16x1xf32>
    %175 = vector.broadcast %167 : vector<16x1xf32> to vector<16x32xf32>
    %176 = arith.subf %159, %175 : vector<16x32xf32>
    %cst_79 = arith.constant 9.99999974E-6 : f32
    %177 = vector.broadcast %cst_79 : f32 to vector<16x1xf32>
    %178 = arith.addf %174, %177 : vector<16x1xf32>
    %179 = math.rsqrt %178 : vector<16x1xf32>
    %180 = vector.broadcast %179 : vector<16x1xf32> to vector<16x32xf32>
    %181 = arith.mulf %176, %180 : vector<16x32xf32>
    %182 = vector.broadcast %161 : vector<1x32xf32> to vector<16x32xf32>
    %183 = arith.mulf %181, %182 : vector<16x32xf32>
    %184 = vector.broadcast %163 : vector<1x32xf32> to vector<16x32xf32>
    %185 = arith.addf %183, %184 : vector<16x32xf32>
    %c0_80 = arith.constant 0 : index
    %c0_81 = arith.constant 0 : index
    %186 = vector.load %arg21[%c0_80, %c0_81] : memref<16x32xf32, #tpu.memory_space<vmem>>, vector<16x32xf32>
    tpu.vector_store %arg21[%c0_80, %c0_81], %185 {strides = array<i32>} : memref<16x32xf32, #tpu.memory_space<vmem>>, vector<16x32xf32>,
    %c1_i32 = arith.constant 1 : i32
    %187 = arith.cmpi eq, %arg0, %c1_i32 : i32
    %188 = arith.extui %187 : i1 to i32
    %c0_i32_82 = arith.constant 0 : i32
    %189 = arith.cmpi ne, %188, %c0_i32_82 : i32
    scf.if %189 {
      %c0_83 = arith.constant 0 : index
      %c0_84 = arith.constant 0 : index
      %190 = vector.load %arg16[%c0_83, %c0_84] : memref<32x128xf32, #tpu.memory_space<vmem>>, vector<32x128xf32>
      %cst_85 = arith.constant dense<0.000000e+00> : vector<16x128xf32>
      %191 = tpu.matmul %185, %190, %cst_85 {dimension_numbers = #tpu.dot_dimension_numbers<[1], [0], [0], [1], [0, 0, 1, 1], [], []>} : vector<16x32xf32>, vector<32x128xf32>, vector<16x128xf32> -> vector<16x128xf32>
      %c0_86 = arith.constant 0 : index
      %c0_87 = arith.constant 0 : index
      %192 = vector.load %arg20[%c0_86, %c0_87] : memref<16x128xf32, #tpu.memory_space<vmem>>, vector<16x128xf32>
      tpu.vector_store %arg20[%c0_86, %c0_87], %191 {strides = array<i32>} : memref<16x128xf32, #tpu.memory_space<vmem>>, vector<16x128xf32>,
      %c0_88 = arith.constant 0 : index
      %193 = memref.load %arg1[%c0_88] : memref<2xi32, #tpu.memory_space<smem>>
      %c1_i32_89 = arith.constant 1 : i32
      %194 = arith.subi %193, %c1_i32_89 : i32
      %c0_i32_90 = arith.constant 0 : i32
      %195 = arith.addi %c0_i32_90, %194 : i32
      %196 = arith.index_cast %195 : i32 to index
      %c0_91 = arith.constant 0 : index
      %197 = vector.load %arg21[%196, %c0_91] : memref<16x32xf32, #tpu.memory_space<vmem>>, vector<1x32xf32>
      %c1 = arith.constant 1 : index
      %198 = memref.load %arg1[%c1] : memref<2xi32, #tpu.memory_space<smem>>
      %c1_i32_92 = arith.constant 1 : i32
      %199 = arith.subi %198, %c1_i32_92 : i32
      %c8_i32 = arith.constant 8 : i32
      %200 = arith.addi %c8_i32, %199 : i32
      %201 = arith.index_cast %200 : i32 to index
      %c0_93 = arith.constant 0 : index
      %202 = vector.load %arg21[%201, %c0_93] : memref<16x32xf32, #tpu.memory_space<vmem>>, vector<1x32xf32>
      %203 = tpu.concatenate %197, %202 in 0 : vector<1x32xf32>, vector<1x32xf32> -> vector<2x32xf32>
      %c0_94 = arith.constant 0 : index
      %c0_95 = arith.constant 0 : index
      %204 = vector.load %arg17[%c0_94, %c0_95] : memref<1x32xf32, #tpu.memory_space<vmem>>, vector<1x32xf32>
      %205 = vector.broadcast %204 : vector<1x32xf32> to vector<2x32xf32>
      %206 = arith.mulf %203, %205 : vector<2x32xf32>
      %cst_96 = arith.constant dense<0.000000e+00> : vector<2xf32>
      %207 = vector.multi_reduction <add>, %206, %cst_96 [1] : vector<2x32xf32> to vector<2xf32>
      %208 = vector.shape_cast %207 : vector<2xf32> to vector<2x1xf32>
      %c0_97 = arith.constant 0 : index
      %c0_98 = arith.constant 0 : index
      %209 = vector.load %arg18[%c0_97, %c0_98] : memref<1x1xf32, #tpu.memory_space<vmem>>, vector<1x1xf32>
      %210 = vector.broadcast %209 : vector<1x1xf32> to vector<2x1xf32>
      %211 = arith.addf %208, %210 : vector<2x1xf32>
      %c0_99 = arith.constant 0 : index
      %c0_100 = arith.constant 0 : index
      %212 = vector.load %arg19[%c0_99, %c0_100] : memref<2x1xf32, #tpu.memory_space<vmem>>, vector<2x1xf32>
      tpu.vector_store %arg19[%c0_99, %c0_100], %211 {strides = array<i32>} : memref<2x1xf32, #tpu.memory_space<vmem>>, vector<2x1xf32>,
    } else {
    }
    return
  }
  func.func @transform_0(%arg0: i32, %arg1: memref<2xi32, #tpu.memory_space<smem>>) -> (i32, i32) {
    %c0_i32 = arith.constant 0 : i32
    %c0_i32_0 = arith.constant 0 : i32
    %c0_i32_1 = arith.constant 0 : i32
    return %c0_i32, %c0_i32_0 : i32, i32
  }
  func.func @transform_1(%arg0: i32, %arg1: memref<2xi32, #tpu.memory_space<smem>>) -> (i32, i32) {
    %c0_i32 = arith.constant 0 : i32
    %c0_i32_0 = arith.constant 0 : i32
    %c0_i32_1 = arith.constant 0 : i32
    return %c0_i32, %c0_i32_0 : i32, i32
  }
  func.func @transform_2(%arg0: i32, %arg1: memref<2xi32, #tpu.memory_space<smem>>) -> (i32, i32, i32) {
    %c0_i32 = arith.constant 0 : i32
    %c0_i32_0 = arith.constant 0 : i32
    %c0_i32_1 = arith.constant 0 : i32
    return %arg0, %c0_i32, %c0_i32_0 : i32, i32, i32
  }
  func.func @transform_3(%arg0: i32, %arg1: memref<2xi32, #tpu.memory_space<smem>>) -> (i32, i32, i32) {
    %c0_i32 = arith.constant 0 : i32
    %c0_i32_0 = arith.constant 0 : i32
    %c0_i32_1 = arith.constant 0 : i32
    return %arg0, %c0_i32, %c0_i32_0 : i32, i32, i32
  }
  func.func @transform_4(%arg0: i32, %arg1: memref<2xi32, #tpu.memory_space<smem>>) -> (i32, i32, i32) {
    %c0_i32 = arith.constant 0 : i32
    %c0_i32_0 = arith.constant 0 : i32
    %c0_i32_1 = arith.constant 0 : i32
    return %arg0, %c0_i32, %c0_i32_0 : i32, i32, i32
  }
  func.func @transform_5(%arg0: i32, %arg1: memref<2xi32, #tpu.memory_space<smem>>) -> (i32, i32, i32) {
    %c0_i32 = arith.constant 0 : i32
    %c0_i32_0 = arith.constant 0 : i32
    %c0_i32_1 = arith.constant 0 : i32
    return %arg0, %c0_i32, %c0_i32_0 : i32, i32, i32
  }
  func.func @transform_6(%arg0: i32, %arg1: memref<2xi32, #tpu.memory_space<smem>>) -> (i32, i32, i32) {
    %c0_i32 = arith.constant 0 : i32
    %c0_i32_0 = arith.constant 0 : i32
    %c0_i32_1 = arith.constant 0 : i32
    return %arg0, %c0_i32, %c0_i32_0 : i32, i32, i32
  }
  func.func @transform_7(%arg0: i32, %arg1: memref<2xi32, #tpu.memory_space<smem>>) -> (i32, i32, i32) {
    %c0_i32 = arith.constant 0 : i32
    %c0_i32_0 = arith.constant 0 : i32
    %c0_i32_1 = arith.constant 0 : i32
    return %arg0, %c0_i32, %c0_i32_0 : i32, i32, i32
  }
  func.func @transform_8(%arg0: i32, %arg1: memref<2xi32, #tpu.memory_space<smem>>) -> (i32, i32, i32) {
    %c0_i32 = arith.constant 0 : i32
    %c0_i32_0 = arith.constant 0 : i32
    %c0_i32_1 = arith.constant 0 : i32
    return %arg0, %c0_i32, %c0_i32_0 : i32, i32, i32
  }
  func.func @transform_9(%arg0: i32, %arg1: memref<2xi32, #tpu.memory_space<smem>>) -> (i32, i32, i32) {
    %c0_i32 = arith.constant 0 : i32
    %c0_i32_0 = arith.constant 0 : i32
    %c0_i32_1 = arith.constant 0 : i32
    return %arg0, %c0_i32, %c0_i32_0 : i32, i32, i32
  }
  func.func @transform_10(%arg0: i32, %arg1: memref<2xi32, #tpu.memory_space<smem>>) -> (i32, i32, i32) {
    %c0_i32 = arith.constant 0 : i32
    %c0_i32_0 = arith.constant 0 : i32
    %c0_i32_1 = arith.constant 0 : i32
    return %arg0, %c0_i32, %c0_i32_0 : i32, i32, i32
  }
  func.func @transform_11(%arg0: i32, %arg1: memref<2xi32, #tpu.memory_space<smem>>) -> (i32, i32, i32) {
    %c0_i32 = arith.constant 0 : i32
    %c0_i32_0 = arith.constant 0 : i32
    %c0_i32_1 = arith.constant 0 : i32
    return %arg0, %c0_i32, %c0_i32_0 : i32, i32, i32
  }
  func.func @transform_12(%arg0: i32, %arg1: memref<2xi32, #tpu.memory_space<smem>>) -> (i32, i32, i32) {
    %c0_i32 = arith.constant 0 : i32
    %c0_i32_0 = arith.constant 0 : i32
    %c0_i32_1 = arith.constant 0 : i32
    return %arg0, %c0_i32, %c0_i32_0 : i32, i32, i32
  }
  func.func @transform_13(%arg0: i32, %arg1: memref<2xi32, #tpu.memory_space<smem>>) -> (i32, i32, i32) {
    %c0_i32 = arith.constant 0 : i32
    %c0_i32_0 = arith.constant 0 : i32
    %c0_i32_1 = arith.constant 0 : i32
    return %arg0, %c0_i32, %c0_i32_0 : i32, i32, i32
  }
  func.func @transform_14(%arg0: i32, %arg1: memref<2xi32, #tpu.memory_space<smem>>) -> (i32, i32) {
    %c0_i32 = arith.constant 0 : i32
    %c0_i32_0 = arith.constant 0 : i32
    %c0_i32_1 = arith.constant 0 : i32
    return %c0_i32, %c0_i32_0 : i32, i32
  }
  func.func @transform_15(%arg0: i32, %arg1: memref<2xi32, #tpu.memory_space<smem>>) -> (i32, i32) {
    %c0_i32 = arith.constant 0 : i32
    %c0_i32_0 = arith.constant 0 : i32
    %c0_i32_1 = arith.constant 0 : i32
    return %c0_i32, %c0_i32_0 : i32, i32
  }
  func.func @transform_16(%arg0: i32, %arg1: memref<2xi32, #tpu.memory_space<smem>>) -> (i32, i32) {
    %c0_i32 = arith.constant 0 : i32
    %c0_i32_0 = arith.constant 0 : i32
    %c0_i32_1 = arith.constant 0 : i32
    return %c0_i32, %c0_i32_0 : i32, i32
  }
  func.func @transform_17(%arg0: i32, %arg1: memref<2xi32, #tpu.memory_space<smem>>) -> (i32, i32) {
    %c0_i32 = arith.constant 0 : i32
    %c0_i32_0 = arith.constant 0 : i32
    %c0_i32_1 = arith.constant 0 : i32
    return %c0_i32, %c0_i32_0 : i32, i32
  }
  func.func @transform_18(%arg0: i32, %arg1: memref<2xi32, #tpu.memory_space<smem>>) -> (i32, i32) {
    %c0_i32 = arith.constant 0 : i32
    %c0_i32_0 = arith.constant 0 : i32
    %c0_i32_1 = arith.constant 0 : i32
    return %c0_i32, %c0_i32_0 : i32, i32
  }
}

</mosaic_0001>

<llo_original>
// kernel: model_forward.1
$region0: #{model_forward.1}
  #allocation0 [shape = 'u32[]', space=smem, size = 0x4, offset = 0x4, fixed_abs, tag = 'smem constant byte address 0x4 - core index']
  #allocation1 [shape = 'u32[144,128]{1,0:T(1,128)}', space=vmem, size = 0x12000, scoped, tag = 'internal scratch']
  #allocation2 [shape = 'f32[16,32]{1,0:T(8,128)}', space=vmem, size = 0x2000, scoped, tag = 'scratch operand']
  #allocation3 [shape = 's32[1]{0}', space=sflag, size = 0x4, scoped, tag = 'scoped memory for model_forward.1']
  #allocation4 [shape = 'u8[512]{0}', space=smem, size = 0x200, scoped, tag = 'prefetched SMEM operand 0']
  #allocation5 [shape = 'f32[1,1]{1,0:T(1,128)S(1)}', space=vmem, size = 0x200, scoped, tag = 'scoped memory for model_forward.1']
  %s0 = inlined_call_operand.vmem [shape: s32[2], index: 0, kind: input, shape index: {}]
  %s1 = inlined_call_operand.vmem [shape: f32[16,32], index: 1, kind: input, shape index: {}]
  %s2 = inlined_call_operand.vmem [shape: f32[16,16], index: 2, kind: input, shape index: {}]
  %s3 = inlined_call_operand.vmem [shape: f32[2,32,96], index: 3, kind: input, shape index: {}]
  %s4 = inlined_call_operand.vmem [shape: f32[2,1,96], index: 4, kind: input, shape index: {}]
  %s5 = inlined_call_operand.vmem [shape: f32[2,32,32], index: 5, kind: input, shape index: {}]
  %s6 = inlined_call_operand.vmem [shape: f32[2,1,32], index: 6, kind: input, shape index: {}]
  %s7 = inlined_call_operand.vmem [shape: f32[2,1,32], index: 7, kind: input, shape index: {}]
  %s8 = inlined_call_operand.vmem [shape: f32[2,1,32], index: 8, kind: input, shape index: {}]
  %s9 = inlined_call_operand.vmem [shape: f32[2,32,128], index: 9, kind: input, shape index: {}]
  %s10 = inlined_call_operand.vmem [shape: f32[2,1,128], index: 10, kind: input, shape index: {}]
  %s11 = inlined_call_operand.vmem [shape: f32[2,128,32], index: 11, kind: input, shape index: {}]
  %s12 = inlined_call_operand.vmem [shape: f32[2,1,32], index: 12, kind: input, shape index: {}]
  %s13 = inlined_call_operand.vmem [shape: f32[2,1,32], index: 13, kind: input, shape index: {}]
  %s14 = inlined_call_operand.vmem [shape: f32[2,1,32], index: 14, kind: input, shape index: {}]
  %s15 = inlined_call_operand.vmem [shape: f32[32,128], index: 15, kind: input, shape index: {}]
  %s16 = inlined_call_operand.vmem [shape: f32[1,32], index: 16, kind: input, shape index: {}]
  %s17 = inlined_call_operand.<no memory space> [shape: f32[1,1], index: 17, kind: input, shape index: {}]
  %s18 = inlined_call_operand.vmem [shape: f32[2,1], index: 18, kind: output, shape index: {0}]
  %s19 = inlined_call_operand.vmem [shape: f32[16,128], index: 19, kind: output, shape index: {1}]
  %20 = xla_tuple %s18, %s19
  %s21 = sld [smem:[#allocation0]]
  $region117: #{model_forward.1} parent=0
    _
  %s23 = ssub.s32 1, %s21
  %s24 = scalar_select 0, %s23, %s21
  %s25 = sshll.u32 %s0, 4
  %s26 = int_to_ptr.vmem [resolvable:$true] %s25
  %28 = dma.vmem_to_smem %s26, 16, [#allocation4], [#allocation3]
  %v29 = vstv %s17
  %30 = vst [vmem:[#allocation5] sm:$0x1] %v29
  %31 = dma.done [#allocation3], 16
  %32 = sfence
  loop: start=0, step=1, limit=4
  $region2: #{model_forward.1} parent=0 // loop_pre_header
    _
  $region3: #{model_forward.1} parent=0 // loop_header
    %s34 = sphi 0, %s38
    %p35 = scmp.ge.s32.totalorder %s34, 4
    %s42 = sphi 0, %s42
    %s44 = sphi 0, %s42
    %s45 = sphi 0, %s44
    %s59 = sphi 0, %s45
    %s63 = sphi 0, %s63
    %s65 = sphi 0, %s63
    %s66 = sphi 0, %s65
    %s80 = sphi 0, %s66
    %s86 = sphi 0, %s88
    %s89 = sphi 0, %s86
    %s90 = sphi 0, %s89
    %s106 = sphi 0, %s90
    %s112 = sphi 0, %s114
    %s115 = sphi 0, %s112
    %s116 = sphi 0, %s115
    %s132 = sphi 0, %s116
    %s138 = sphi 0, %s140
    %s141 = sphi 0, %s138
    %s142 = sphi 0, %s141
    %s158 = sphi 0, %s142
    %s164 = sphi 0, %s166
    %s167 = sphi 0, %s164
    %s168 = sphi 0, %s167
    %s184 = sphi 0, %s168
    %s190 = sphi 0, %s192
    %s193 = sphi 0, %s190
    %s194 = sphi 0, %s193
    %s210 = sphi 0, %s194
    %s216 = sphi 0, %s218
    %s219 = sphi 0, %s216
    %s220 = sphi 0, %s219
    %s236 = sphi 0, %s220
    %s242 = sphi 0, %s244
    %s245 = sphi 0, %s242
    %s246 = sphi 0, %s245
    %s262 = sphi 0, %s246
    %s268 = sphi 0, %s270
    %s271 = sphi 0, %s268
    %s272 = sphi 0, %s271
    %s288 = sphi 0, %s272
    %s294 = sphi 0, %s296
    %s297 = sphi 0, %s294
    %s298 = sphi 0, %s297
    %s314 = sphi 0, %s298
    %s320 = sphi 0, %s322
    %s323 = sphi 0, %s320
    %s324 = sphi 0, %s323
    %s340 = sphi 0, %s324
    %s346 = sphi 0, %s348
    %s349 = sphi 0, %s346
    %s350 = sphi 0, %s349
    %s366 = sphi 0, %s350
    %s372 = sphi 0, %s374
    %s375 = sphi 0, %s372
    %s376 = sphi 0, %s375
    %s392 = sphi 0, %s376
    %s396 = sphi 0, %s396
    %s398 = sphi 0, %s396
    %s399 = sphi 0, %s398
    %s413 = sphi 0, %s399
    %s417 = sphi 0, %s417
    %s419 = sphi 0, %s417
    %s420 = sphi 0, %s419
    %s434 = sphi 0, %s420
    %s438 = sphi 0, %s438
    %s440 = sphi 0, %s438
    %s441 = sphi 0, %s440
    %s455 = sphi 0, %s441
    %s459 = sphi 0, %s459
    %s461 = sphi 0, %s459
    %s462 = sphi 0, %s461
    %s476 = sphi 0, %s462
    %s480 = sphi 0, %s480
    %s482 = sphi 0, %s480
    %s483 = sphi 0, %s482
    %s497 = sphi 0, %s483
  $region4: #{model_forward.1} parent=0 // loop_header_branch
    %37 = sbr.rel (%p35) target = $region8
  $region5: #{model_forward.1} parent=0 // loop_body
    %s39 = ssub.s32 %s34, 1
    %s40 = ssub.s32 %s34, 2
    %s41 = sadd.s32 %s34, 1
    %s43 = sadd.s32 %s42, 1
    %p46 = scmp.eq.s32.totalorder %s34, 1
    %p47 = scmp.ne.s32.totalorder %s42, %s44
    %p48 = scmp.eq.s32.totalorder %s34, 0
    %p49 = por %p47, %p48
    %p50 = scmp.ne.s32.totalorder %s42, %s44
    %p51 = scmp.eq.s32.totalorder %s39, 1
    %p52 = por %p50, %p51
    %p53 = scmp.ne.s32.totalorder %s44, %s45
    %p54 = scmp.eq.s32.totalorder %s39, 0
    %p55 = por %p53, %p54
    %p56 = scmp.ne.s32.totalorder %s44, %s45
    %p57 = scmp.eq.s32.totalorder %s40, 1
    %p58 = por %p56, %p57
    %p60 = scmp.ne.s32.totalorder %s45, %s59
    %p61 = scmp.eq.s32.totalorder %s40, 0
    %p62 = por %p60, %p61
    %s64 = sadd.s32 %s63, 1
    %p67 = scmp.eq.s32.totalorder %s34, 1
    %p68 = scmp.ne.s32.totalorder %s63, %s65
    %p69 = scmp.eq.s32.totalorder %s34, 0
    %p70 = por %p68, %p69
    %p71 = scmp.ne.s32.totalorder %s63, %s65
    %p72 = scmp.eq.s32.totalorder %s39, 1
    %p73 = por %p71, %p72
    %p74 = scmp.ne.s32.totalorder %s65, %s66
    %p75 = scmp.eq.s32.totalorder %s39, 0
    %p76 = por %p74, %p75
    %p77 = scmp.ne.s32.totalorder %s65, %s66
    %p78 = scmp.eq.s32.totalorder %s40, 1
    %p79 = por %p77, %p78
    %p81 = scmp.ne.s32.totalorder %s66, %s80
    %p82 = scmp.eq.s32.totalorder %s40, 0
    %p83 = por %p81, %p82
    %s84 = ssub.s32 %s34, %s41
    %p85 = scmp.eq.s32.totalorder %s84, 0
    %s87 = sadd.s32 %s86, 1
    %s88 = scalar_select %p85, %s86, %s87
    %p91 = pneg %p85
    %p92 = scmp.eq.s32.totalorder %s34, 1
    %p93 = por %p91, %p92
    %p94 = scmp.ne.s32.totalorder %s86, %s89
    %p95 = scmp.eq.s32.totalorder %s34, 0
    %p96 = por %p94, %p95
    %p97 = scmp.ne.s32.totalorder %s86, %s89
    %p98 = scmp.eq.s32.totalorder %s39, 1
    %p99 = por %p97, %p98
    %p100 = scmp.ne.s32.totalorder %s89, %s90
    %p101 = scmp.eq.s32.totalorder %s39, 0
    %p102 = por %p100, %p101
    %p103 = scmp.ne.s32.totalorder %s89, %s90
    %p104 = scmp.eq.s32.totalorder %s40, 1
    %p105 = por %p103, %p104
    %p107 = scmp.ne.s32.totalorder %s90, %s106
    %p108 = scmp.eq.s32.totalorder %s40, 0
    %p109 = por %p107, %p108
    %s110 = ssub.s32 %s34, %s41
    %p111 = scmp.eq.s32.totalorder %s110, 0
    %s113 = sadd.s32 %s112, 1
    %s114 = scalar_select %p111, %s112, %s113
    %p117 = pneg %p111
    %p118 = scmp.eq.s32.totalorder %s34, 1
    %p119 = por %p117, %p118
    %p120 = scmp.ne.s32.totalorder %s112, %s115
    %p121 = scmp.eq.s32.totalorder %s34, 0
    %p122 = por %p120, %p121
    %p123 = scmp.ne.s32.totalorder %s112, %s115
    %p124 = scmp.eq.s32.totalorder %s39, 1
    %p125 = por %p123, %p124
    %p126 = scmp.ne.s32.totalorder %s115, %s116
    %p127 = scmp.eq.s32.totalorder %s39, 0
    %p128 = por %p126, %p127
    %p129 = scmp.ne.s32.totalorder %s115, %s116
    %p130 = scmp.eq.s32.totalorder %s40, 1
    %p131 = por %p129, %p130
    %p133 = scmp.ne.s32.totalorder %s116, %s132
    %p134 = scmp.eq.s32.totalorder %s40, 0
    %p135 = por %p133, %p134
    %s136 = ssub.s32 %s34, %s41
    %p137 = scmp.eq.s32.totalorder %s136, 0
    %s139 = sadd.s32 %s138, 1
    %s140 = scalar_select %p137, %s138, %s139
    %p143 = pneg %p137
    %p144 = scmp.eq.s32.totalorder %s34, 1
    %p145 = por %p143, %p144
    %p146 = scmp.ne.s32.totalorder %s138, %s141
    %p147 = scmp.eq.s32.totalorder %s34, 0
    %p148 = por %p146, %p147
    %p149 = scmp.ne.s32.totalorder %s138, %s141
    %p150 = scmp.eq.s32.totalorder %s39, 1
    %p151 = por %p149, %p150
    %p152 = scmp.ne.s32.totalorder %s141, %s142
    %p153 = scmp.eq.s32.totalorder %s39, 0
    %p154 = por %p152, %p153
    %p155 = scmp.ne.s32.totalorder %s141, %s142
    %p156 = scmp.eq.s32.totalorder %s40, 1
    %p157 = por %p155, %p156
    %p159 = scmp.ne.s32.totalorder %s142, %s158
    %p160 = scmp.eq.s32.totalorder %s40, 0
    %p161 = por %p159, %p160
    %s162 = ssub.s32 %s34, %s41
    %p163 = scmp.eq.s32.totalorder %s162, 0
    %s165 = sadd.s32 %s164, 1
    %s166 = scalar_select %p163, %s164, %s165
    %p169 = pneg %p163
    %p170 = scmp.eq.s32.totalorder %s34, 1
    %p171 = por %p169, %p170
    %p172 = scmp.ne.s32.totalorder %s164, %s167
    %p173 = scmp.eq.s32.totalorder %s34, 0
    %p174 = por %p172, %p173
    %p175 = scmp.ne.s32.totalorder %s164, %s167
    %p176 = scmp.eq.s32.totalorder %s39, 1
    %p177 = por %p175, %p176
    %p178 = scmp.ne.s32.totalorder %s167, %s168
    %p179 = scmp.eq.s32.totalorder %s39, 0
    %p180 = por %p178, %p179
    %p181 = scmp.ne.s32.totalorder %s167, %s168
    %p182 = scmp.eq.s32.totalorder %s40, 1
    %p183 = por %p181, %p182
    %p185 = scmp.ne.s32.totalorder %s168, %s184
    %p186 = scmp.eq.s32.totalorder %s40, 0
    %p187 = por %p185, %p186
    %s188 = ssub.s32 %s34, %s41
    %p189 = scmp.eq.s32.totalorder %s188, 0
    %s191 = sadd.s32 %s190, 1
    %s192 = scalar_select %p189, %s190, %s191
    %p195 = pneg %p189
    %p196 = scmp.eq.s32.totalorder %s34, 1
    %p197 = por %p195, %p196
    %p198 = scmp.ne.s32.totalorder %s190, %s193
    %p199 = scmp.eq.s32.totalorder %s34, 0
    %p200 = por %p198, %p199
    %p201 = scmp.ne.s32.totalorder %s190, %s193
    %p202 = scmp.eq.s32.totalorder %s39, 1
    %p203 = por %p201, %p202
    %p204 = scmp.ne.s32.totalorder %s193, %s194
    %p205 = scmp.eq.s32.totalorder %s39, 0
    %p206 = por %p204, %p205
    %p207 = scmp.ne.s32.totalorder %s193, %s194
    %p208 = scmp.eq.s32.totalorder %s40, 1
    %p209 = por %p207, %p208
    %p211 = scmp.ne.s32.totalorder %s194, %s210
    %p212 = scmp.eq.s32.totalorder %s40, 0
    %p213 = por %p211, %p212
    %s214 = ssub.s32 %s34, %s41
    %p215 = scmp.eq.s32.totalorder %s214, 0
    %s217 = sadd.s32 %s216, 1
    %s218 = scalar_select %p215, %s216, %s217
    %p221 = pneg %p215
    %p222 = scmp.eq.s32.totalorder %s34, 1
    %p223 = por %p221, %p222
    %p224 = scmp.ne.s32.totalorder %s216, %s219
    %p225 = scmp.eq.s32.totalorder %s34, 0
    %p226 = por %p224, %p225
    %p227 = scmp.ne.s32.totalorder %s216, %s219
    %p228 = scmp.eq.s32.totalorder %s39, 1
    %p229 = por %p227, %p228
    %p230 = scmp.ne.s32.totalorder %s219, %s220
    %p231 = scmp.eq.s32.totalorder %s39, 0
    %p232 = por %p230, %p231
    %p233 = scmp.ne.s32.totalorder %s219, %s220
    %p234 = scmp.eq.s32.totalorder %s40, 1
    %p235 = por %p233, %p234
    %p237 = scmp.ne.s32.totalorder %s220, %s236
    %p238 = scmp.eq.s32.totalorder %s40, 0
    %p239 = por %p237, %p238
    %s240 = ssub.s32 %s34, %s41
    %p241 = scmp.eq.s32.totalorder %s240, 0
    %s243 = sadd.s32 %s242, 1
    %s244 = scalar_select %p241, %s242, %s243
    %p247 = pneg %p241
    %p248 = scmp.eq.s32.totalorder %s34, 1
    %p249 = por %p247, %p248
    %p250 = scmp.ne.s32.totalorder %s242, %s245
    %p251 = scmp.eq.s32.totalorder %s34, 0
    %p252 = por %p250, %p251
    %p253 = scmp.ne.s32.totalorder %s242, %s245
    %p254 = scmp.eq.s32.totalorder %s39, 1
    %p255 = por %p253, %p254
    %p256 = scmp.ne.s32.totalorder %s245, %s246
    %p257 = scmp.eq.s32.totalorder %s39, 0
    %p258 = por %p256, %p257
    %p259 = scmp.ne.s32.totalorder %s245, %s246
    %p260 = scmp.eq.s32.totalorder %s40, 1
    %p261 = por %p259, %p260
    %p263 = scmp.ne.s32.totalorder %s246, %s262
    %p264 = scmp.eq.s32.totalorder %s40, 0
    %p265 = por %p263, %p264
    %s266 = ssub.s32 %s34, %s41
    %p267 = scmp.eq.s32.totalorder %s266, 0
    %s269 = sadd.s32 %s268, 1
    %s270 = scalar_select %p267, %s268, %s269
    %p273 = pneg %p267
    %p274 = scmp.eq.s32.totalorder %s34, 1
    %p275 = por %p273, %p274
    %p276 = scmp.ne.s32.totalorder %s268, %s271
    %p277 = scmp.eq.s32.totalorder %s34, 0
    %p278 = por %p276, %p277
    %p279 = scmp.ne.s32.totalorder %s268, %s271
    %p280 = scmp.eq.s32.totalorder %s39, 1
    %p281 = por %p279, %p280
    %p282 = scmp.ne.s32.totalorder %s271, %s272
    %p283 = scmp.eq.s32.totalorder %s39, 0
    %p284 = por %p282, %p283
    %p285 = scmp.ne.s32.totalorder %s271, %s272
    %p286 = scmp.eq.s32.totalorder %s40, 1
    %p287 = por %p285, %p286
    %p289 = scmp.ne.s32.totalorder %s272, %s288
    %p290 = scmp.eq.s32.totalorder %s40, 0
    %p291 = por %p289, %p290
    %s292 = ssub.s32 %s34, %s41
    %p293 = scmp.eq.s32.totalorder %s292, 0
    %s295 = sadd.s32 %s294, 1
    %s296 = scalar_select %p293, %s294, %s295
    %p299 = pneg %p293
    %p300 = scmp.eq.s32.totalorder %s34, 1
    %p301 = por %p299, %p300
    %p302 = scmp.ne.s32.totalorder %s294, %s297
    %p303 = scmp.eq.s32.totalorder %s34, 0
    %p304 = por %p302, %p303
    %p305 = scmp.ne.s32.totalorder %s294, %s297
    %p306 = scmp.eq.s32.totalorder %s39, 1
    %p307 = por %p305, %p306
    %p308 = scmp.ne.s32.totalorder %s297, %s298
    %p309 = scmp.eq.s32.totalorder %s39, 0
    %p310 = por %p308, %p309
    %p311 = scmp.ne.s32.totalorder %s297, %s298
    %p312 = scmp.eq.s32.totalorder %s40, 1
    %p313 = por %p311, %p312
    %p315 = scmp.ne.s32.totalorder %s298, %s314
    %p316 = scmp.eq.s32.totalorder %s40, 0
    %p317 = por %p315, %p316
    %s318 = ssub.s32 %s34, %s41
    %p319 = scmp.eq.s32.totalorder %s318, 0
    %s321 = sadd.s32 %s320, 1
    %s322 = scalar_select %p319, %s320, %s321
    %p325 = pneg %p319
    %p326 = scmp.eq.s32.totalorder %s34, 1
    %p327 = por %p325, %p326
    %p328 = scmp.ne.s32.totalorder %s320, %s323
    %p329 = scmp.eq.s32.totalorder %s34, 0
    %p330 = por %p328, %p329
    %p331 = scmp.ne.s32.totalorder %s320, %s323
    %p332 = scmp.eq.s32.totalorder %s39, 1
    %p333 = por %p331, %p332
    %p334 = scmp.ne.s32.totalorder %s323, %s324
    %p335 = scmp.eq.s32.totalorder %s39, 0
    %p336 = por %p334, %p335
    %p337 = scmp.ne.s32.totalorder %s323, %s324
    %p338 = scmp.eq.s32.totalorder %s40, 1
    %p339 = por %p337, %p338
    %p341 = scmp.ne.s32.totalorder %s324, %s340
    %p342 = scmp.eq.s32.totalorder %s40, 0
    %p343 = por %p341, %p342
    %s344 = ssub.s32 %s34, %s41
    %p345 = scmp.eq.s32.totalorder %s344, 0
    %s347 = sadd.s32 %s346, 1
    %s348 = scalar_select %p345, %s346, %s347
    %p351 = pneg %p345
    %p352 = scmp.eq.s32.totalorder %s34, 1
    %p353 = por %p351, %p352
    %p354 = scmp.ne.s32.totalorder %s346, %s349
    %p355 = scmp.eq.s32.totalorder %s34, 0
    %p356 = por %p354, %p355
    %p357 = scmp.ne.s32.totalorder %s346, %s349
    %p358 = scmp.eq.s32.totalorder %s39, 1
    %p359 = por %p357, %p358
    %p360 = scmp.ne.s32.totalorder %s349, %s350
    %p361 = scmp.eq.s32.totalorder %s39, 0
    %p362 = por %p360, %p361
    %p363 = scmp.ne.s32.totalorder %s349, %s350
    %p364 = scmp.eq.s32.totalorder %s40, 1
    %p365 = por %p363, %p364
    %p367 = scmp.ne.s32.totalorder %s350, %s366
    %p368 = scmp.eq.s32.totalorder %s40, 0
    %p369 = por %p367, %p368
    %s370 = ssub.s32 %s34, %s41
    %p371 = scmp.eq.s32.totalorder %s370, 0
    %s373 = sadd.s32 %s372, 1
    %s374 = scalar_select %p371, %s372, %s373
    %p377 = pneg %p371
    %p378 = scmp.eq.s32.totalorder %s34, 1
    %p379 = por %p377, %p378
    %p380 = scmp.ne.s32.totalorder %s372, %s375
    %p381 = scmp.eq.s32.totalorder %s34, 0
    %p382 = por %p380, %p381
    %p383 = scmp.ne.s32.totalorder %s372, %s375
    %p384 = scmp.eq.s32.totalorder %s39, 1
    %p385 = por %p383, %p384
    %p386 = scmp.ne.s32.totalorder %s375, %s376
    %p387 = scmp.eq.s32.totalorder %s39, 0
    %p388 = por %p386, %p387
    %p389 = scmp.ne.s32.totalorder %s375, %s376
    %p390 = scmp.eq.s32.totalorder %s40, 1
    %p391 = por %p389, %p390
    %p393 = scmp.ne.s32.totalorder %s376, %s392
    %p394 = scmp.eq.s32.totalorder %s40, 0
    %p395 = por %p393, %p394
    %s397 = sadd.s32 %s396, 1
    %p400 = scmp.eq.s32.totalorder %s34, 1
    %p401 = scmp.ne.s32.totalorder %s396, %s398
    %p402 = scmp.eq.s32.totalorder %s34, 0
    %p403 = por %p401, %p402
    %p404 = scmp.ne.s32.totalorder %s396, %s398
    %p405 = scmp.eq.s32.totalorder %s39, 1
    %p406 = por %p404, %p405
    %p407 = scmp.ne.s32.totalorder %s398, %s399
    %p408 = scmp.eq.s32.totalorder %s39, 0
    %p409 = por %p407, %p408
    %p410 = scmp.ne.s32.totalorder %s398, %s399
    %p411 = scmp.eq.s32.totalorder %s40, 1
    %p412 = por %p410, %p411
    %p414 = scmp.ne.s32.totalorder %s399, %s413
    %p415 = scmp.eq.s32.totalorder %s40, 0
    %p416 = por %p414, %p415
    %s418 = sadd.s32 %s417, 1
    %p421 = scmp.eq.s32.totalorder %s34, 1
    %p422 = scmp.ne.s32.totalorder %s417, %s419
    %p423 = scmp.eq.s32.totalorder %s34, 0
    %p424 = por %p422, %p423
    %p425 = scmp.ne.s32.totalorder %s417, %s419
    %p426 = scmp.eq.s32.totalorder %s39, 1
    %p427 = por %p425, %p426
    %p428 = scmp.ne.s32.totalorder %s419, %s420
    %p429 = scmp.eq.s32.totalorder %s39, 0
    %p430 = por %p428, %p429
    %p431 = scmp.ne.s32.totalorder %s419, %s420
    %p432 = scmp.eq.s32.totalorder %s40, 1
    %p433 = por %p431, %p432
    %p435 = scmp.ne.s32.totalorder %s420, %s434
    %p436 = scmp.eq.s32.totalorder %s40, 0
    %p437 = por %p435, %p436
    %s439 = sadd.s32 %s438, 1
    %p442 = scmp.eq.s32.totalorder %s34, 1
    %p443 = scmp.ne.s32.totalorder %s438, %s440
    %p444 = scmp.eq.s32.totalorder %s34, 0
    %p445 = por %p443, %p444
    %p446 = scmp.ne.s32.totalorder %s438, %s440
    %p447 = scmp.eq.s32.totalorder %s39, 1
    %p448 = por %p446, %p447
    %p449 = scmp.ne.s32.totalorder %s440, %s441
    %p450 = scmp.eq.s32.totalorder %s39, 0
    %p451 = por %p449, %p450
    %p452 = scmp.ne.s32.totalorder %s440, %s441
    %p453 = scmp.eq.s32.totalorder %s40, 1
    %p454 = por %p452, %p453
    %p456 = scmp.ne.s32.totalorder %s441, %s455
    %p457 = scmp.eq.s32.totalorder %s40, 0
    %p458 = por %p456, %p457
    %s460 = sadd.s32 %s459, 1
    %p463 = scmp.eq.s32.totalorder %s34, 1
    %p464 = scmp.ne.s32.totalorder %s459, %s461
    %p465 = scmp.eq.s32.totalorder %s34, 0
    %p466 = por %p464, %p465
    %p467 = scmp.ne.s32.totalorder %s459, %s461
    %p468 = scmp.eq.s32.totalorder %s39, 1
    %p469 = por %p467, %p468
    %p470 = scmp.ne.s32.totalorder %s461, %s462
    %p471 = scmp.eq.s32.totalorder %s39, 0
    %p472 = por %p470, %p471
    %p473 = scmp.ne.s32.totalorder %s461, %s462
    %p474 = scmp.eq.s32.totalorder %s40, 1
    %p475 = por %p473, %p474
    %p477 = scmp.ne.s32.totalorder %s462, %s476
    %p478 = scmp.eq.s32.totalorder %s40, 0
    %p479 = por %p477, %p478
    %s481 = sadd.s32 %s480, 1
    %p484 = scmp.eq.s32.totalorder %s34, 1
    %p485 = scmp.ne.s32.totalorder %s480, %s482
    %p486 = scmp.eq.s32.totalorder %s34, 0
    %p487 = por %p485, %p486
    %p488 = scmp.ne.s32.totalorder %s480, %s482
    %p489 = scmp.eq.s32.totalorder %s39, 1
    %p490 = por %p488, %p489
    %p491 = scmp.ne.s32.totalorder %s482, %s483
    %p492 = scmp.eq.s32.totalorder %s39, 0
    %p493 = por %p491, %p492
    %p494 = scmp.ne.s32.totalorder %s482, %s483
    %p495 = scmp.eq.s32.totalorder %s40, 1
    %p496 = por %p494, %p495
    %p498 = scmp.ne.s32.totalorder %s483, %s497
    %p499 = scmp.eq.s32.totalorder %s40, 0
    %p500 = por %p498, %p499
    %p501 = scmp.le.s32.totalorder 1, %s34
    %p502 = scmp.lt.s32.totalorder %s34, 3
    %p503 = pnand %p501, %p502
    %p504 = pneg %p503
    // Predicated region
    $region9: #{model_forward.1} parent=5 // pred_check
      _
    $region10: #{model_forward.1} parent=5 // pred_check_branch
      %506 = sbr.rel (%p503) target = $region12
    $region11: #{model_forward.1} parent=5 // pred_region
      %s507 = ssub.s32 %s34, 1
      // Predicated region
      $region13: #{model_forward.1} parent=11 // pred_check
        %p508 = pneg %p55
      $region14: #{model_forward.1} parent=11 // pred_check_branch
        %510 = sbr.rel (%p508) target = $region16
      $region15: #{model_forward.1} parent=11 // pred_region
        _
      $region16: #{model_forward.1} parent=11 // pred_fallthru
        _
      // Predicated region
      $region17: #{model_forward.1} parent=11 // pred_check
        %p511 = pneg %p76
      $region18: #{model_forward.1} parent=11 // pred_check_branch
        %513 = sbr.rel (%p511) target = $region20
      $region19: #{model_forward.1} parent=11 // pred_region
        _
      $region20: #{model_forward.1} parent=11 // pred_fallthru
        _
      // Predicated region
      $region21: #{model_forward.1} parent=11 // pred_check
        %p514 = pneg %p409
      $region22: #{model_forward.1} parent=11 // pred_check_branch
        %516 = sbr.rel (%p514) target = $region24
      $region23: #{model_forward.1} parent=11 // pred_region
        _
      $region24: #{model_forward.1} parent=11 // pred_fallthru
        _
      // Predicated region
      $region25: #{model_forward.1} parent=11 // pred_check
        %p517 = pneg %p430
      $region26: #{model_forward.1} parent=11 // pred_check_branch
        %519 = sbr.rel (%p517) target = $region28
      $region27: #{model_forward.1} parent=11 // pred_region
        _
      $region28: #{model_forward.1} parent=11 // pred_fallthru
        _
      // Predicated region
      $region29: #{model_forward.1} parent=11 // pred_check
        %p520 = pneg %p451
      $region30: #{model_forward.1} parent=11 // pred_check_branch
        %522 = sbr.rel (%p520) target = $region32
      $region31: #{model_forward.1} parent=11 // pred_region
        _
      $region32: #{model_forward.1} parent=11 // pred_fallthru
        _
    $region12: #{model_forward.1} parent=5 // pred_fallthru
      _
    %p523 = scmp.lt.s32.totalorder %s34, 2
    // Predicated region
    $region33: #{model_forward.1} parent=5 // pred_check
      %p524 = pneg %p523
    $region34: #{model_forward.1} parent=5 // pred_check_branch
      %526 = sbr.rel (%p524) target = $region36
    $region35: #{model_forward.1} parent=5 // pred_region
      // Predicated region
      $region37: #{model_forward.1} parent=35 // pred_check
        %p527 = pneg %p96
      $region38: #{model_forward.1} parent=35 // pred_check_branch
        %529 = sbr.rel (%p527) target = $region40
      $region39: #{model_forward.1} parent=35 // pred_region
        %p530 = scmp.lt.s32.totalorder %s34, 1
        %s531 = scalar_select %p530, %s34, 1
        %s532 = smul.addr %s531, 4
        %s533 = smul.addr %s532, 8
        %s534 = scalar_lea.vmem %s3, %s533
      $region40: #{model_forward.1} parent=35 // pred_fallthru
        _
      // Predicated region
      $region41: #{model_forward.1} parent=35 // pred_check
        %p535 = pneg %p122
      $region42: #{model_forward.1} parent=35 // pred_check_branch
        %537 = sbr.rel (%p535) target = $region44
      $region43: #{model_forward.1} parent=35 // pred_region
        %p538 = scmp.lt.s32.totalorder %s34, 1
        %s539 = scalar_select %p538, %s34, 1
        %s540 = scalar_lea.vmem %s4, %s539
      $region44: #{model_forward.1} parent=35 // pred_fallthru
        _
      // Predicated region
      $region45: #{model_forward.1} parent=35 // pred_check
        %p541 = pneg %p148
      $region46: #{model_forward.1} parent=35 // pred_check_branch
        %543 = sbr.rel (%p541) target = $region48
      $region47: #{model_forward.1} parent=35 // pred_region
        %p544 = scmp.lt.s32.totalorder %s34, 1
        %s545 = scalar_select %p544, %s34, 1
        %s546 = smul.addr %s545, 4
        %s547 = smul.addr %s546, 8
        %s548 = scalar_lea.vmem %s5, %s547
      $region48: #{model_forward.1} parent=35 // pred_fallthru
        _
      // Predicated region
      $region49: #{model_forward.1} parent=35 // pred_check
        %p549 = pneg %p174
      $region50: #{model_forward.1} parent=35 // pred_check_branch
        %551 = sbr.rel (%p549) target = $region52
      $region51: #{model_forward.1} parent=35 // pred_region
        %p552 = scmp.lt.s32.totalorder %s34, 1
        %s553 = scalar_select %p552, %s34, 1
        %s554 = scalar_lea.vmem %s6, %s553
      $region52: #{model_forward.1} parent=35 // pred_fallthru
        _
      // Predicated region
      $region53: #{model_forward.1} parent=35 // pred_check
        %p555 = pneg %p200
      $region54: #{model_forward.1} parent=35 // pred_check_branch
        %557 = sbr.rel (%p555) target = $region56
      $region55: #{model_forward.1} parent=35 // pred_region
        %p558 = scmp.lt.s32.totalorder %s34, 1
        %s559 = scalar_select %p558, %s34, 1
        %s560 = scalar_lea.vmem %s7, %s559
      $region56: #{model_forward.1} parent=35 // pred_fallthru
        _
      // Predicated region
      $region57: #{model_forward.1} parent=35 // pred_check
        %p561 = pneg %p226
      $region58: #{model_forward.1} parent=35 // pred_check_branch
        %563 = sbr.rel (%p561) target = $region60
      $region59: #{model_forward.1} parent=35 // pred_region
        %p564 = scmp.lt.s32.totalorder %s34, 1
        %s565 = scalar_select %p564, %s34, 1
        %s566 = scalar_lea.vmem %s8, %s565
      $region60: #{model_forward.1} parent=35 // pred_fallthru
        _
      // Predicated region
      $region61: #{model_forward.1} parent=35 // pred_check
        %p567 = pneg %p252
      $region62: #{model_forward.1} parent=35 // pred_check_branch
        %569 = sbr.rel (%p567) target = $region64
      $region63: #{model_forward.1} parent=35 // pred_region
        %p570 = scmp.lt.s32.totalorder %s34, 1
        %s571 = scalar_select %p570, %s34, 1
        %s572 = smul.addr %s571, 4
        %s573 = smul.addr %s572, 8
        %s574 = scalar_lea.vmem %s9, %s573
      $region64: #{model_forward.1} parent=35 // pred_fallthru
        _
      // Predicated region
      $region65: #{model_forward.1} parent=35 // pred_check
        %p575 = pneg %p278
      $region66: #{model_forward.1} parent=35 // pred_check_branch
        %577 = sbr.rel (%p575) target = $region68
      $region67: #{model_forward.1} parent=35 // pred_region
        %p578 = scmp.lt.s32.totalorder %s34, 1
        %s579 = scalar_select %p578, %s34, 1
        %s580 = scalar_lea.vmem %s10, %s579
      $region68: #{model_forward.1} parent=35 // pred_fallthru
        _
      // Predicated region
      $region69: #{model_forward.1} parent=35 // pred_check
        %p581 = pneg %p304
      $region70: #{model_forward.1} parent=35 // pred_check_branch
        %583 = sbr.rel (%p581) target = $region72
      $region71: #{model_forward.1} parent=35 // pred_region
        %p584 = scmp.lt.s32.totalorder %s34, 1
        %s585 = scalar_select %p584, %s34, 1
        %s586 = smul.addr %s585, 16
        %s587 = smul.addr %s586, 8
        %s588 = scalar_lea.vmem %s11, %s587
      $region72: #{model_forward.1} parent=35 // pred_fallthru
        _
      // Predicated region
      $region73: #{model_forward.1} parent=35 // pred_check
        %p589 = pneg %p330
      $region74: #{model_forward.1} parent=35 // pred_check_branch
        %591 = sbr.rel (%p589) target = $region76
      $region75: #{model_forward.1} parent=35 // pred_region
        %p592 = scmp.lt.s32.totalorder %s34, 1
        %s593 = scalar_select %p592, %s34, 1
        %s594 = scalar_lea.vmem %s12, %s593
      $region76: #{model_forward.1} parent=35 // pred_fallthru
        _
      // Predicated region
      $region77: #{model_forward.1} parent=35 // pred_check
        %p595 = pneg %p356
      $region78: #{model_forward.1} parent=35 // pred_check_branch
        %597 = sbr.rel (%p595) target = $region80
      $region79: #{model_forward.1} parent=35 // pred_region
        %p598 = scmp.lt.s32.totalorder %s34, 1
        %s599 = scalar_select %p598, %s34, 1
        %s600 = scalar_lea.vmem %s13, %s599
      $region80: #{model_forward.1} parent=35 // pred_fallthru
        _
      // Predicated region
      $region81: #{model_forward.1} parent=35 // pred_check
        %p601 = pneg %p382
      $region82: #{model_forward.1} parent=35 // pred_check_branch
        %603 = sbr.rel (%p601) target = $region84
      $region83: #{model_forward.1} parent=35 // pred_region
        %p604 = scmp.lt.s32.totalorder %s34, 1
        %s605 = scalar_select %p604, %s34, 1
        %s606 = scalar_lea.vmem %s14, %s605
      $region84: #{model_forward.1} parent=35 // pred_fallthru
        _
    $region36: #{model_forward.1} parent=5 // pred_fallthru
      _
    %p607 = scmp.le.s32.totalorder 1, %s34
    %p608 = scmp.lt.s32.totalorder %s34, 3
    %p609 = pnand %p607, %p608
    %p610 = pneg %p609
    // Predicated region
    $region85: #{model_forward.1} parent=5 // pred_check
      _
    $region86: #{model_forward.1} parent=5 // pred_check_branch
      %612 = sbr.rel (%p609) target = $region88
    $region87: #{model_forward.1} parent=5 // pred_region
      %s613 = ssub.s32 %s34, 1
      %p614 = pneg %p55
      %p615 = pneg %p52
      %p616 = pneg %p76
      %p617 = pneg %p73
      %p618 = scmp.lt.s32.totalorder %s39, 1
      %s619 = scalar_select %p618, %s39, 1
      %s620 = smul.addr %s619, 4
      %s621 = smul.addr %s620, 8
      %s622 = scalar_lea.vmem %s3, %s621
      %p623 = pneg %p102
      %p624 = pneg %p99
      %p625 = scmp.lt.s32.totalorder %s39, 1
      %s626 = scalar_select %p625, %s39, 1
      %s627 = scalar_lea.vmem %s4, %s626
      %p628 = pneg %p128
      %p629 = pneg %p125
      %p630 = scmp.lt.s32.totalorder %s39, 1
      %s631 = scalar_select %p630, %s39, 1
      %s632 = smul.addr %s631, 4
      %s633 = smul.addr %s632, 8
      %s634 = scalar_lea.vmem %s5, %s633
      %p635 = pneg %p154
      %p636 = pneg %p151
      %p637 = scmp.lt.s32.totalorder %s39, 1
      %s638 = scalar_select %p637, %s39, 1
      %s639 = scalar_lea.vmem %s6, %s638
      %p640 = pneg %p180
      %p641 = pneg %p177
      %p642 = scmp.lt.s32.totalorder %s39, 1
      %s643 = scalar_select %p642, %s39, 1
      %s644 = scalar_lea.vmem %s7, %s643
      %p645 = pneg %p206
      %p646 = pneg %p203
      %p647 = scmp.lt.s32.totalorder %s39, 1
      %s648 = scalar_select %p647, %s39, 1
      %s649 = scalar_lea.vmem %s8, %s648
      %p650 = pneg %p232
      %p651 = pneg %p229
      %p652 = scmp.lt.s32.totalorder %s39, 1
      %s653 = scalar_select %p652, %s39, 1
      %s654 = smul.addr %s653, 4
      %s655 = smul.addr %s654, 8
      %s656 = scalar_lea.vmem %s9, %s655
      %p657 = pneg %p258
      %p658 = pneg %p255
      %p659 = scmp.lt.s32.totalorder %s39, 1
      %s660 = scalar_select %p659, %s39, 1
      %s661 = scalar_lea.vmem %s10, %s660
      %p662 = pneg %p284
      %p663 = pneg %p281
      %p664 = scmp.lt.s32.totalorder %s39, 1
      %s665 = scalar_select %p664, %s39, 1
      %s666 = smul.addr %s665, 16
      %s667 = smul.addr %s666, 8
      %s668 = scalar_lea.vmem %s11, %s667
      %p669 = pneg %p310
      %p670 = pneg %p307
      %p671 = scmp.lt.s32.totalorder %s39, 1
      %s672 = scalar_select %p671, %s39, 1
      %s673 = scalar_lea.vmem %s12, %s672
      %p674 = pneg %p336
      %p675 = pneg %p333
      %p676 = scmp.lt.s32.totalorder %s39, 1
      %s677 = scalar_select %p676, %s39, 1
      %s678 = scalar_lea.vmem %s13, %s677
      %p679 = pneg %p362
      %p680 = pneg %p359
      %p681 = scmp.lt.s32.totalorder %s39, 1
      %s682 = scalar_select %p681, %s39, 1
      %s683 = scalar_lea.vmem %s14, %s682
      %p684 = pneg %p388
      %p685 = pneg %p385
      %p686 = pneg %p409
      %p687 = pneg %p406
      %p688 = pneg %p430
      %p689 = pneg %p427
      %p690 = pneg %p451
      %p691 = pneg %p448
      %p692 = pneg %p472
      %p693 = pneg %p469
      %p694 = pneg %p493
      %p695 = pneg %p490
      %p696 = scmp.lt.s32.totalorder %s39, 1
      %s697 = scalar_select %p696, %s39, 1
      %s698 = smul.addr %s697, 4
      %s699 = smul.addr %s698, 8
      %s700 = scalar_lea.vmem %s3, %s699
      %p701 = scmp.lt.s32.totalorder %s39, 1
      %s702 = scalar_select %p701, %s39, 1
      %s703 = scalar_lea.vmem %s4, %s702
      %p704 = scmp.lt.s32.totalorder %s39, 1
      %s705 = scalar_select %p704, %s39, 1
      %s706 = smul.addr %s705, 4
      %s707 = smul.addr %s706, 8
      %s708 = scalar_lea.vmem %s5, %s707
      %p709 = scmp.lt.s32.totalorder %s39, 1
      %s710 = scalar_select %p709, %s39, 1
      %s711 = scalar_lea.vmem %s6, %s710
      %p712 = scmp.lt.s32.totalorder %s39, 1
      %s713 = scalar_select %p712, %s39, 1
      %s714 = scalar_lea.vmem %s7, %s713
      %p715 = scmp.lt.s32.totalorder %s39, 1
      %s716 = scalar_select %p715, %s39, 1
      %s717 = scalar_lea.vmem %s8, %s716
      %p718 = scmp.lt.s32.totalorder %s39, 1
      %s719 = scalar_select %p718, %s39, 1
      %s720 = smul.addr %s719, 4
      %s721 = smul.addr %s720, 8
      %s722 = scalar_lea.vmem %s9, %s721
      %p723 = scmp.lt.s32.totalorder %s39, 1
      %s724 = scalar_select %p723, %s39, 1
      %s725 = scalar_lea.vmem %s10, %s724
      %p726 = scmp.lt.s32.totalorder %s39, 1
      %s727 = scalar_select %p726, %s39, 1
      %s728 = smul.addr %s727, 16
      %s729 = smul.addr %s728, 8
      %s730 = scalar_lea.vmem %s11, %s729
      %p731 = scmp.lt.s32.totalorder %s39, 1
      %s732 = scalar_select %p731, %s39, 1
      %s733 = scalar_lea.vmem %s12, %s732
      %p734 = scmp.lt.s32.totalorder %s39, 1
      %s735 = scalar_select %p734, %s39, 1
      %s736 = scalar_lea.vmem %s13, %s735
      %p737 = scmp.lt.s32.totalorder %s39, 1
      %s738 = scalar_select %p737, %s39, 1
      %s739 = scalar_lea.vmem %s14, %s738
      %p740 = scmp.eq.s32.totalorder %s39, 0
      // Predicated region
      $region89: #{model_forward.1} parent=87 // pred_check
        %p741 = pneg %p740
      $region90: #{model_forward.1} parent=87 // pred_check_branch
        %743 = sbr.rel (%p741) target = $region92
      $region91: #{model_forward.1} parent=87 // pred_region
        %v744 = vld [vmem:[%s1] sm:$0xff]
        %v745 = vld [vmem:[%s1 + $0x8] sm:$0xff]
        %vm746 = vcmask 261120
        %747 = vst.msk [vmem:[#allocation2] sm:$0xff] %vm746, %v744
        %748 = vst.msk [vmem:[#allocation2 + $0x8] sm:$0xff] %vm746, %v745
      $region92: #{model_forward.1} parent=87 // pred_fallthru
        _
      %v749 = vld [vmem:[#allocation2] sm:$0xff]
      %v750 = vld [vmem:[#allocation2 + $0x8] sm:$0xff]
      %v751 = vld [vmem:[%s2] sm:$0xff]
      %v752 = vld [vmem:[%s2 + $0x8] sm:$0xff]
      %v753 = vld [vmem:[%s700] sm:$0xff]
      %v754 = vld [vmem:[%s700 + $0x8] sm:$0xff]
      %v755 = vld [vmem:[%s700 + $0x10] sm:$0xff]
      %v756 = vld [vmem:[%s700 + $0x18] sm:$0xff]
      %v757 = vld [vmem:[%s703] sm:$0x1]
      %v759 = vlaneseq
      %v760 = vshrl.u32 %v759, 7
      %v761 = vsub.s32 0, %v760
      %v762 = vrot.slane %v757, %v761
      %vm764 = vcmask 261120
      %v766 = vsel %vm764, %v749, 0
      %v769 = vsel %vm764, %v750, 0
      %771 = vmatprep.subr.mxu0 0.0
      %772 = vmatpush1.msra.mxu0 %v753
      %773 = vmatprep.subr.mxu0 0.0
      %774 = vmatpush1.msra.mxu0 %v754
      %775 = vmatprep.subr.mxu0 0.0
      %776 = vmatpush1.msra.mxu0 %v755
      %777 = vmatprep.subr.mxu0 0.0
      %778 = vmatpush1.msra.mxu0 %v756
      %779 = vmatprep.subr.mxu0 0.0
      %780 = vmatpush1.msra.mxu0 0.0
      %781 = vmatprep.subr.mxu0 0.0
      %782 = vmatpush1.msra.mxu0 0.0
      %783 = vmatprep.subr.mxu0 0.0
      %784 = vmatpush1.msra.mxu0 0.0
      %785 = vmatprep.subr.mxu0 0.0
      %786 = vmatpush1.msra.mxu0 0.0
      %787 = vmatprep.subr.mxu0 0.0
      %788 = vmatpush1.msra.mxu0 0.0
      %789 = vmatprep.subr.mxu0 0.0
      %790 = vmatpush1.msra.mxu0 0.0
      %791 = vmatprep.subr.mxu0 0.0
      %792 = vmatpush1.msra.mxu0 0.0
      %793 = vmatprep.subr.mxu0 0.0
      %794 = vmatpush1.msra.mxu0 0.0
      %795 = vmatprep.subr.mxu0 0.0
      %796 = vmatpush1.msra.mxu0 0.0
      %797 = vmatprep.subr.mxu0 0.0
      %798 = vmatpush1.msra.mxu0 0.0
      %799 = vmatprep.subr.mxu0 0.0
      %800 = vmatpush1.msra.mxu0 0.0
      %801 = vmatprep.subr.mxu0 0.0
      %802 = vmatpush1.msra.mxu0 0.0
      %803 = vmatprep.subr.mxu0 0.0
      %804 = vmatpush1.msra.mxu0 0.0
      %805 = vmatprep.subr.mxu0 0.0
      %806 = vmatpush1.msra.mxu0 0.0
      %807 = vmatprep.subr.mxu0 0.0
      %808 = vmatpush1.msra.mxu0 0.0
      %809 = vmatprep.subr.mxu0 0.0
      %810 = vmatpush1.msra.mxu0 0.0
      %811 = vmatprep.subr.mxu0 0.0
      %812 = vmatpush1.msra.mxu0 0.0
      %813 = vmatprep.subr.mxu0 0.0
      %814 = vmatpush1.msra.mxu0 0.0
      %815 = vmatprep.subr.mxu0 0.0
      %816 = vmatpush1.msra.mxu0 0.0
      %817 = vmatprep.subr.mxu0 0.0
      %818 = vmatpush1.msra.mxu0 0.0
      %819 = vmatprep.subr.mxu0 0.0
      %820 = vmatpush1.msra.mxu0 0.0
      %821 = vmatprep.subr.mxu0 0.0
      %822 = vmatpush1.msra.mxu0 0.0
      %823 = vmatprep.subr.mxu0 0.0
      %824 = vmatpush1.msra.mxu0 0.0
      %825 = vmatprep.subr.mxu0 0.0
      %826 = vmatpush1.msra.mxu0 0.0
      %827 = vmatprep.subr.mxu0 0.0
      %828 = vmatpush1.msra.mxu0 0.0
      %829 = vmatprep.subr.mxu0 0.0
      %830 = vmatpush1.msra.mxu0 0.0
      %831 = vmatprep.subr.mxu0 0.0
      %832 = vmatpush1.msra.mxu0 0.0
      %833 = vmatprep.subr.mxu0 0.0
      %834 = vmatpush1.msra.mxu0 0.0
      %835 = vmatprep.mubr.f32.mxu0 0.0
      %836 = vmatmul.mubr.f32.gmra.mrb[0].mxu0 %v766
      %v837 = vpop.f32.mrb[0].mxu0
      %v838 = vadd.f32 %v762, %v837
      %v839 = vpop.f32.mrb[0].mxu0
      %840 = vmatprep.mubr.f32.mxu0 0.0
      %841 = vmatmul.mubr.f32.gmra.mrb[0].mxu0 %v769
      %v842 = vpop.f32.mrb[0].mxu0
      %v843 = vadd.f32 %v762, %v842
      %v844 = vpop.f32.mrb[0].mxu0
      %845 = vdwg.mxu0
      %v846 = vld [vmem:[%s708] sm:$0xff]
      %v847 = vld [vmem:[%s708 + $0x8] sm:$0xff]
      %v848 = vld [vmem:[%s708 + $0x10] sm:$0xff]
      %v849 = vld [vmem:[%s708 + $0x18] sm:$0xff]
      %852 = vrot.lane.b32.xlu0 %v838, 96
      %v853 = vpop.permute.xlu0 %852
      %854 = vrot.lane.b32.xlu0 %v843, 96
      %v855 = vpop.permute.xlu0 %854
      %vm856 = vcmask 64512
      %v857 = vsel %vm856, %v838, 0
      %v859 = vsel %vm856, %v843, 0
      %v861 = vsel %vm856, %v853, 0
      %v863 = vsel %vm856, %v855, 0
      %865 = vmatprep.subr.mxu0 0.0
      %866 = vmatpush1.xpose.msra.mxu0 %v861
      %867 = vmatprep.subr.mxu0 0.0
      %868 = vmatpush1.xpose.msra.mxu0 %v863
      %869 = vmatprep.subr.mxu0 0.0
      %870 = vmatpush1.xpose.msra.mxu0 0.0
      %871 = vmatprep.subr.mxu0 0.0
      %872 = vmatpush1.xpose.msra.mxu0 0.0
      %873 = vmatprep.subr.mxu0 0.0
      %874 = vmatpush1.xpose.msra.mxu0 0.0
      %875 = vmatprep.subr.mxu0 0.0
      %876 = vmatpush1.xpose.msra.mxu0 0.0
      %877 = vmatprep.subr.mxu0 0.0
      %878 = vmatpush1.xpose.msra.mxu0 0.0
      %879 = vmatprep.subr.mxu0 0.0
      %880 = vmatpush1.xpose.msra.mxu0 0.0
      %881 = vmatprep.subr.mxu0 0.0
      %882 = vmatpush1.xpose.msra.mxu0 0.0
      %883 = vmatprep.subr.mxu0 0.0
      %884 = vmatpush1.xpose.msra.mxu0 0.0
      %885 = vmatprep.subr.mxu0 0.0
      %886 = vmatpush1.xpose.msra.mxu0 0.0
      %887 = vmatprep.subr.mxu0 0.0
      %888 = vmatpush1.xpose.msra.mxu0 0.0
      %889 = vmatprep.subr.mxu0 0.0
      %890 = vmatpush1.xpose.msra.mxu0 0.0
      %891 = vmatprep.subr.mxu0 0.0
      %892 = vmatpush1.xpose.msra.mxu0 0.0
      %893 = vmatprep.subr.mxu0 0.0
      %894 = vmatpush1.xpose.msra.mxu0 0.0
      %895 = vmatprep.subr.mxu0 0.0
      %896 = vmatpush1.xpose.msra.mxu0 0.0
      %897 = vmatprep.subr.mxu0 0.0
      %898 = vmatpush1.xpose.msra.mxu0 0.0
      %899 = vmatprep.subr.mxu0 0.0
      %900 = vmatpush1.xpose.msra.mxu0 0.0
      %901 = vmatprep.subr.mxu0 0.0
      %902 = vmatpush1.xpose.msra.mxu0 0.0
      %903 = vmatprep.subr.mxu0 0.0
      %904 = vmatpush1.xpose.msra.mxu0 0.0
      %905 = vmatprep.subr.mxu0 0.0
      %906 = vmatpush1.xpose.msra.mxu0 0.0
      %907 = vmatprep.subr.mxu0 0.0
      %908 = vmatpush1.xpose.msra.mxu0 0.0
      %909 = vmatprep.subr.mxu0 0.0
      %910 = vmatpush1.xpose.msra.mxu0 0.0
      %911 = vmatprep.subr.mxu0 0.0
      %912 = vmatpush1.xpose.msra.mxu0 0.0
      %913 = vmatprep.subr.mxu0 0.0
      %914 = vmatpush1.xpose.msra.mxu0 0.0
      %915 = vmatprep.subr.mxu0 0.0
      %916 = vmatpush1.xpose.msra.mxu0 0.0
      %917 = vmatprep.subr.mxu0 0.0
      %918 = vmatpush1.xpose.msra.mxu0 0.0
      %919 = vmatprep.subr.mxu0 0.0
      %920 = vmatpush1.xpose.msra.mxu0 0.0
      %921 = vmatprep.subr.mxu0 0.0
      %922 = vmatpush1.xpose.msra.mxu0 0.0
      %923 = vmatprep.subr.mxu0 0.0
      %924 = vmatpush1.xpose.msra.mxu0 0.0
      %925 = vmatprep.subr.mxu0 0.0
      %926 = vmatpush1.xpose.msra.mxu0 0.0
      %927 = vmatprep.subr.mxu0 0.0
      %928 = vmatpush1.xpose.msra.mxu0 0.0
      %929 = vmatprep.mubr.f32.mxu0 0.0
      %930 = vmatmul.mubr.f32.gmra.mrb[0].mxu0 %v857
      %v931 = vpop.f32.mrb[0].mxu0
      %v932 = vadd.f32 0.0, %v931
      %v933 = vpop.f32.mrb[0].mxu0
      %934 = vmatprep.mubr.f32.mxu0 0.0
      %935 = vmatmul.mubr.f32.gmra.mrb[0].mxu0 %v859
      %v936 = vpop.f32.mrb[0].mxu0
      %v937 = vadd.f32 0.0, %v936
      %v938 = vpop.f32.mrb[0].mxu0
      %939 = vdwg.mxu0
      %v940 = vmul.f32 %v932, 0.35355338
      %v941 = vmul.f32 %v937, 0.35355338
      %v942 = vadd.f32 %v940, %v751
      %v943 = vadd.f32 %v941, %v752
      %vm944 = vcmask 130048
      %v945 = vsel %vm944, %v942, -inf
      %946 = vmax.xlane.f32.xlu0 %v945
      %v947 = vpop.xlane.xlu0 %946
      %v948 = vsel %vm944, %v943, -inf
      %949 = vmax.xlane.f32.xlu0 %v948
      %v950 = vpop.xlane.xlu0 %949
      %v951 = vsub.f32 %v942, %v947
      %v952 = vsub.f32 %v943, %v950
      %v953 = vmul.f32 %v951, 1.442695
      %v954 = vpow.pop %v953
      %v955 = vmul.f32 %v952, 1.442695
      %v956 = vpow.pop %v955
      %v957 = vsel %vm944, %v954, 0.0
      %958 = vadd.xlane.f32.xlu0 %v957
      %v959 = vpop.xlane.xlu0 %958
      %v960 = vsel %vm944, %v956, 0.0
      %961 = vadd.xlane.f32.xlu0 %v960
      %v962 = vpop.xlane.xlu0 %961
      %v963 = vrcp.pop %v959
      %v964 = vrcp.pop %v962
      %v965 = vmul.f32 %v954, %v963
      %v966 = vmul.f32 %v956, %v964
      %967 = vrot.lane.b32.xlu0 %v838, 64
      %v968 = vpop.permute.xlu0 %967
      %969 = vrot.lane.b32.xlu0 %v843, 64
      %v970 = vpop.permute.xlu0 %969
      %v974 = vsel %vm944, %v965, 0
      %v977 = vsel %vm944, %v966, 0
      %979 = vmatprep.subr.mxu0 0.0
      %980 = vmatpush1.msra.mxu0 %v968
      %981 = vmatprep.subr.mxu0 0.0
      %982 = vmatpush1.msra.mxu0 %v970
      %983 = vmatprep.subr.mxu0 0.0
      %984 = vmatpush1.msra.mxu0 0.0
      %985 = vmatprep.subr.mxu0 0.0
      %986 = vmatpush1.msra.mxu0 0.0
      %987 = vmatprep.subr.mxu0 0.0
      %988 = vmatpush1.msra.mxu0 0.0
      %989 = vmatprep.subr.mxu0 0.0
      %990 = vmatpush1.msra.mxu0 0.0
      %991 = vmatprep.subr.mxu0 0.0
      %992 = vmatpush1.msra.mxu0 0.0
      %993 = vmatprep.subr.mxu0 0.0
      %994 = vmatpush1.msra.mxu0 0.0
      %995 = vmatprep.subr.mxu0 0.0
      %996 = vmatpush1.msra.mxu0 0.0
      %997 = vmatprep.subr.mxu0 0.0
      %998 = vmatpush1.msra.mxu0 0.0
      %999 = vmatprep.subr.mxu0 0.0
      %1000 = vmatpush1.msra.mxu0 0.0
      %1001 = vmatprep.subr.mxu0 0.0
      %1002 = vmatpush1.msra.mxu0 0.0
      %1003 = vmatprep.subr.mxu0 0.0
      %1004 = vmatpush1.msra.mxu0 0.0
      %1005 = vmatprep.subr.mxu0 0.0
      %1006 = vmatpush1.msra.mxu0 0.0
      %1007 = vmatprep.subr.mxu0 0.0
      %1008 = vmatpush1.msra.mxu0 0.0
      %1009 = vmatprep.subr.mxu0 0.0
      %1010 = vmatpush1.msra.mxu0 0.0
      %1011 = vmatprep.subr.mxu0 0.0
      %1012 = vmatpush1.msra.mxu0 0.0
      %1013 = vmatprep.subr.mxu0 0.0
      %1014 = vmatpush1.msra.mxu0 0.0
      %1015 = vmatprep.subr.mxu0 0.0
      %1016 = vmatpush1.msra.mxu0 0.0
      %1017 = vmatprep.subr.mxu0 0.0
      %1018 = vmatpush1.msra.mxu0 0.0
      %1019 = vmatprep.subr.mxu0 0.0
      %1020 = vmatpush1.msra.mxu0 0.0
      %1021 = vmatprep.subr.mxu0 0.0
      %1022 = vmatpush1.msra.mxu0 0.0
      %1023 = vmatprep.subr.mxu0 0.0
      %1024 = vmatpush1.msra.mxu0 0.0
      %1025 = vmatprep.subr.mxu0 0.0
      %1026 = vmatpush1.msra.mxu0 0.0
      %1027 = vmatprep.subr.mxu0 0.0
      %1028 = vmatpush1.msra.mxu0 0.0
      %1029 = vmatprep.subr.mxu0 0.0
      %1030 = vmatpush1.msra.mxu0 0.0
      %1031 = vmatprep.subr.mxu0 0.0
      %1032 = vmatpush1.msra.mxu0 0.0
      %1033 = vmatprep.subr.mxu0 0.0
      %1034 = vmatpush1.msra.mxu0 0.0
      %1035 = vmatprep.subr.mxu0 0.0
      %1036 = vmatpush1.msra.mxu0 0.0
      %1037 = vmatprep.subr.mxu0 0.0
      %1038 = vmatpush1.msra.mxu0 0.0
      %1039 = vmatprep.subr.mxu0 0.0
      %1040 = vmatpush1.msra.mxu0 0.0
      %1041 = vmatprep.subr.mxu0 0.0
      %1042 = vmatpush1.msra.mxu0 0.0
      %1043 = vmatprep.mubr.f32.mxu0 0.0
      %1044 = vmatmul.mubr.f32.gmra.mrb[0].mxu0 %v974
      %v1045 = vpop.f32.mrb[0].mxu0
      %v1046 = vadd.f32 0.0, %v1045
      %v1047 = vpop.f32.mrb[0].mxu0
      %1048 = vmatprep.mubr.f32.mxu0 0.0
      %1049 = vmatmul.mubr.f32.gmra.mrb[0].mxu0 %v977
      %v1050 = vpop.f32.mrb[0].mxu0
      %v1051 = vadd.f32 0.0, %v1050
      %v1052 = vpop.f32.mrb[0].mxu0
      %1053 = vdwg.mxu0
      %1054 = vrot.lane.b32.xlu0 %v838, 120
      %v1055 = vpop.permute.xlu0 %1054
      %1056 = vrot.lane.b32.xlu0 %v843, 120
      %v1057 = vpop.permute.xlu0 %1056
      %1058 = vrot.lane.b32.xlu0 %v838, 88
      %v1059 = vpop.permute.xlu0 %1058
      %1060 = vrot.lane.b32.xlu0 %v843, 88
      %v1061 = vpop.permute.xlu0 %1060
      %v1062 = vsel %vm856, %v1055, 0
      %v1064 = vsel %vm856, %v1057, 0
      %v1066 = vsel %vm856, %v1059, 0
      %v1068 = vsel %vm856, %v1061, 0
      %1070 = vmatprep.subr.mxu0 0.0
      %1071 = vmatpush1.xpose.msra.mxu0 %v1066
      %1072 = vmatprep.subr.mxu0 0.0
      %1073 = vmatpush1.xpose.msra.mxu0 %v1068
      %1074 = vmatprep.subr.mxu0 0.0
      %1075 = vmatpush1.xpose.msra.mxu0 0.0
      %1076 = vmatprep.subr.mxu0 0.0
      %1077 = vmatpush1.xpose.msra.mxu0 0.0
      %1078 = vmatprep.subr.mxu0 0.0
      %1079 = vmatpush1.xpose.msra.mxu0 0.0
      %1080 = vmatprep.subr.mxu0 0.0
      %1081 = vmatpush1.xpose.msra.mxu0 0.0
      %1082 = vmatprep.subr.mxu0 0.0
      %1083 = vmatpush1.xpose.msra.mxu0 0.0
      %1084 = vmatprep.subr.mxu0 0.0
      %1085 = vmatpush1.xpose.msra.mxu0 0.0
      %1086 = vmatprep.subr.mxu0 0.0
      %1087 = vmatpush1.xpose.msra.mxu0 0.0
      %1088 = vmatprep.subr.mxu0 0.0
      %1089 = vmatpush1.xpose.msra.mxu0 0.0
      %1090 = vmatprep.subr.mxu0 0.0
      %1091 = vmatpush1.xpose.msra.mxu0 0.0
      %1092 = vmatprep.subr.mxu0 0.0
      %1093 = vmatpush1.xpose.msra.mxu0 0.0
      %1094 = vmatprep.subr.mxu0 0.0
      %1095 = vmatpush1.xpose.msra.mxu0 0.0
      %1096 = vmatprep.subr.mxu0 0.0
      %1097 = vmatpush1.xpose.msra.mxu0 0.0
      %1098 = vmatprep.subr.mxu0 0.0
      %1099 = vmatpush1.xpose.msra.mxu0 0.0
      %1100 = vmatprep.subr.mxu0 0.0
      %1101 = vmatpush1.xpose.msra.mxu0 0.0
      %1102 = vmatprep.subr.mxu0 0.0
      %1103 = vmatpush1.xpose.msra.mxu0 0.0
      %1104 = vmatprep.subr.mxu0 0.0
      %1105 = vmatpush1.xpose.msra.mxu0 0.0
      %1106 = vmatprep.subr.mxu0 0.0
      %1107 = vmatpush1.xpose.msra.mxu0 0.0
      %1108 = vmatprep.subr.mxu0 0.0
      %1109 = vmatpush1.xpose.msra.mxu0 0.0
      %1110 = vmatprep.subr.mxu0 0.0
      %1111 = vmatpush1.xpose.msra.mxu0 0.0
      %1112 = vmatprep.subr.mxu0 0.0
      %1113 = vmatpush1.xpose.msra.mxu0 0.0
      %1114 = vmatprep.subr.mxu0 0.0
      %1115 = vmatpush1.xpose.msra.mxu0 0.0
      %1116 = vmatprep.subr.mxu0 0.0
      %1117 = vmatpush1.xpose.msra.mxu0 0.0
      %1118 = vmatprep.subr.mxu0 0.0
      %1119 = vmatpush1.xpose.msra.mxu0 0.0
      %1120 = vmatprep.subr.mxu0 0.0
      %1121 = vmatpush1.xpose.msra.mxu0 0.0
      %1122 = vmatprep.subr.mxu0 0.0
      %1123 = vmatpush1.xpose.msra.mxu0 0.0
      %1124 = vmatprep.subr.mxu0 0.0
      %1125 = vmatpush1.xpose.msra.mxu0 0.0
      %1126 = vmatprep.subr.mxu0 0.0
      %1127 = vmatpush1.xpose.msra.mxu0 0.0
      %1128 = vmatprep.subr.mxu0 0.0
      %1129 = vmatpush1.xpose.msra.mxu0 0.0
      %1130 = vmatprep.subr.mxu0 0.0
      %1131 = vmatpush1.xpose.msra.mxu0 0.0
      %1132 = vmatprep.subr.mxu0 0.0
      %1133 = vmatpush1.xpose.msra.mxu0 0.0
      %1134 = vmatprep.mubr.f32.mxu0 0.0
      %1135 = vmatmul.mubr.f32.gmra.mrb[0].mxu0 %v1062
      %v1136 = vpop.f32.mrb[0].mxu0
      %v1137 = vadd.f32 0.0, %v1136
      %v1138 = vpop.f32.mrb[0].mxu0
      %1139 = vmatprep.mubr.f32.mxu0 0.0
      %1140 = vmatmul.mubr.f32.gmra.mrb[0].mxu0 %v1064
      %v1141 = vpop.f32.mrb[0].mxu0
      %v1142 = vadd.f32 0.0, %v1141
      %v1143 = vpop.f32.mrb[0].mxu0
      %1144 = vdwg.mxu0
      %v1145 = vmul.f32 %v1137, 0.35355338
      %v1146 = vmul.f32 %v1142, 0.35355338
      %v1147 = vadd.f32 %v1145, %v751
      %v1148 = vadd.f32 %v1146, %v752
      %v1149 = vsel %vm944, %v1147, -inf
      %1150 = vmax.xlane.f32.xlu0 %v1149
      %v1151 = vpop.xlane.xlu0 %1150
      %v1152 = vsel %vm944, %v1148, -inf
      %1153 = vmax.xlane.f32.xlu0 %v1152
      %v1154 = vpop.xlane.xlu0 %1153
      %v1155 = vsub.f32 %v1147, %v1151
      %v1156 = vsub.f32 %v1148, %v1154
      %v1157 = vmul.f32 %v1155, 1.442695
      %v1158 = vpow.pop %v1157
      %v1159 = vmul.f32 %v1156, 1.442695
      %v1160 = vpow.pop %v1159
      %v1161 = vsel %vm944, %v1158, 0.0
      %1162 = vadd.xlane.f32.xlu0 %v1161
      %v1163 = vpop.xlane.xlu0 %1162
      %v1164 = vsel %vm944, %v1160, 0.0
      %1165 = vadd.xlane.f32.xlu0 %v1164
      %v1166 = vpop.xlane.xlu0 %1165
      %v1167 = vrcp.pop %v1163
      %v1168 = vrcp.pop %v1166
      %v1169 = vmul.f32 %v1158, %v1167
      %v1170 = vmul.f32 %v1160, %v1168
      %1171 = vrot.lane.b32.xlu0 %v838, 56
      %v1172 = vpop.permute.xlu0 %1171
      %1173 = vrot.lane.b32.xlu0 %v843, 56
      %v1174 = vpop.permute.xlu0 %1173
      %v1178 = vsel %vm944, %v1169, 0
      %v1181 = vsel %vm944, %v1170, 0
      %1183 = vmatprep.subr.mxu0 0.0
      %1184 = vmatpush1.msra.mxu0 %v1172
      %1185 = vmatprep.subr.mxu0 0.0
      %1186 = vmatpush1.msra.mxu0 %v1174
      %1187 = vmatprep.subr.mxu0 0.0
      %1188 = vmatpush1.msra.mxu0 0.0
      %1189 = vmatprep.subr.mxu0 0.0
      %1190 = vmatpush1.msra.mxu0 0.0
      %1191 = vmatprep.subr.mxu0 0.0
      %1192 = vmatpush1.msra.mxu0 0.0
      %1193 = vmatprep.subr.mxu0 0.0
      %1194 = vmatpush1.msra.mxu0 0.0
      %1195 = vmatprep.subr.mxu0 0.0
      %1196 = vmatpush1.msra.mxu0 0.0
      %1197 = vmatprep.subr.mxu0 0.0
      %1198 = vmatpush1.msra.mxu0 0.0
      %1199 = vmatprep.subr.mxu0 0.0
      %1200 = vmatpush1.msra.mxu0 0.0
      %1201 = vmatprep.subr.mxu0 0.0
      %1202 = vmatpush1.msra.mxu0 0.0
      %1203 = vmatprep.subr.mxu0 0.0
      %1204 = vmatpush1.msra.mxu0 0.0
      %1205 = vmatprep.subr.mxu0 0.0
      %1206 = vmatpush1.msra.mxu0 0.0
      %1207 = vmatprep.subr.mxu0 0.0
      %1208 = vmatpush1.msra.mxu0 0.0
      %1209 = vmatprep.subr.mxu0 0.0
      %1210 = vmatpush1.msra.mxu0 0.0
      %1211 = vmatprep.subr.mxu0 0.0
      %1212 = vmatpush1.msra.mxu0 0.0
      %1213 = vmatprep.subr.mxu0 0.0
      %1214 = vmatpush1.msra.mxu0 0.0
      %1215 = vmatprep.subr.mxu0 0.0
      %1216 = vmatpush1.msra.mxu0 0.0
      %1217 = vmatprep.subr.mxu0 0.0
      %1218 = vmatpush1.msra.mxu0 0.0
      %1219 = vmatprep.subr.mxu0 0.0
      %1220 = vmatpush1.msra.mxu0 0.0
      %1221 = vmatprep.subr.mxu0 0.0
      %1222 = vmatpush1.msra.mxu0 0.0
      %1223 = vmatprep.subr.mxu0 0.0
      %1224 = vmatpush1.msra.mxu0 0.0
      %1225 = vmatprep.subr.mxu0 0.0
      %1226 = vmatpush1.msra.mxu0 0.0
      %1227 = vmatprep.subr.mxu0 0.0
      %1228 = vmatpush1.msra.mxu0 0.0
      %1229 = vmatprep.subr.mxu0 0.0
      %1230 = vmatpush1.msra.mxu0 0.0
      %1231 = vmatprep.subr.mxu0 0.0
      %1232 = vmatpush1.msra.mxu0 0.0
      %1233 = vmatprep.subr.mxu0 0.0
      %1234 = vmatpush1.msra.mxu0 0.0
      %1235 = vmatprep.subr.mxu0 0.0
      %1236 = vmatpush1.msra.mxu0 0.0
      %1237 = vmatprep.subr.mxu0 0.0
      %1238 = vmatpush1.msra.mxu0 0.0
      %1239 = vmatprep.subr.mxu0 0.0
      %1240 = vmatpush1.msra.mxu0 0.0
      %1241 = vmatprep.subr.mxu0 0.0
      %1242 = vmatpush1.msra.mxu0 0.0
      %1243 = vmatprep.subr.mxu0 0.0
      %1244 = vmatpush1.msra.mxu0 0.0
      %1245 = vmatprep.subr.mxu0 0.0
      %1246 = vmatpush1.msra.mxu0 0.0
      %1247 = vmatprep.mubr.f32.mxu0 0.0
      %1248 = vmatmul.mubr.f32.gmra.mrb[0].mxu0 %v1178
      %v1249 = vpop.f32.mrb[0].mxu0
      %v1250 = vadd.f32 0.0, %v1249
      %v1251 = vpop.f32.mrb[0].mxu0
      %1252 = vmatprep.mubr.f32.mxu0 0.0
      %1253 = vmatmul.mubr.f32.gmra.mrb[0].mxu0 %v1181
      %v1254 = vpop.f32.mrb[0].mxu0
      %v1255 = vadd.f32 0.0, %v1254
      %v1256 = vpop.f32.mrb[0].mxu0
      %1257 = vdwg.mxu0
      %v1259 = vsel %vm856, %v1250, 0
      %v1262 = vsel %vm856, %v1255, 0
      %1264 = vmatprep.subr.mxu0 0.0
      %1265 = vmatpush1.msra.mxu0 %v847
      %1266 = vmatprep.subr.mxu0 0.0
      %1267 = vmatpush1.msra.mxu0 0.0
      %1268 = vmatprep.subr.mxu0 0.0
      %1269 = vmatpush1.msra.mxu0 0.0
      %1270 = vmatprep.subr.mxu0 0.0
      %1271 = vmatpush1.msra.mxu0 0.0
      %1272 = vmatprep.subr.mxu0 0.0
      %1273 = vmatpush1.msra.mxu0 0.0
      %1274 = vmatprep.subr.mxu0 0.0
      %1275 = vmatpush1.msra.mxu0 0.0
      %1276 = vmatprep.subr.mxu0 0.0
      %1277 = vmatpush1.msra.mxu0 0.0
      %1278 = vmatprep.subr.mxu0 0.0
      %1279 = vmatpush1.msra.mxu0 0.0
      %1280 = vmatprep.subr.mxu0 0.0
      %1281 = vmatpush1.msra.mxu0 0.0
      %1282 = vmatprep.subr.mxu0 0.0
      %1283 = vmatpush1.msra.mxu0 0.0
      %1284 = vmatprep.subr.mxu0 0.0
      %1285 = vmatpush1.msra.mxu0 0.0
      %1286 = vmatprep.subr.mxu0 0.0
      %1287 = vmatpush1.msra.mxu0 0.0
      %1288 = vmatprep.subr.mxu0 0.0
      %1289 = vmatpush1.msra.mxu0 0.0
      %1290 = vmatprep.subr.mxu0 0.0
      %1291 = vmatpush1.msra.mxu0 0.0
      %1292 = vmatprep.subr.mxu0 0.0
      %1293 = vmatpush1.msra.mxu0 0.0
      %1294 = vmatprep.subr.mxu0 0.0
      %1295 = vmatpush1.msra.mxu0 0.0
      %1296 = vmatprep.subr.mxu0 0.0
      %1297 = vmatpush1.msra.mxu0 0.0
      %1298 = vmatprep.subr.mxu0 0.0
      %1299 = vmatpush1.msra.mxu0 0.0
      %1300 = vmatprep.subr.mxu0 0.0
      %1301 = vmatpush1.msra.mxu0 0.0
      %1302 = vmatprep.subr.mxu0 0.0
      %1303 = vmatpush1.msra.mxu0 0.0
      %1304 = vmatprep.subr.mxu0 0.0
      %1305 = vmatpush1.msra.mxu0 0.0
      %1306 = vmatprep.subr.mxu0 0.0
      %1307 = vmatpush1.msra.mxu0 0.0
      %1308 = vmatprep.subr.mxu0 0.0
      %1309 = vmatpush1.msra.mxu0 0.0
      %1310 = vmatprep.subr.mxu0 0.0
      %1311 = vmatpush1.msra.mxu0 0.0
      %1312 = vmatprep.subr.mxu0 0.0
      %1313 = vmatpush1.msra.mxu0 0.0
      %1314 = vmatprep.subr.mxu0 0.0
      %1315 = vmatpush1.msra.mxu0 0.0
      %1316 = vmatprep.subr.mxu0 0.0
      %1317 = vmatpush1.msra.mxu0 0.0
      %1318 = vmatprep.subr.mxu0 0.0
      %1319 = vmatpush1.msra.mxu0 0.0
      %1320 = vmatprep.subr.mxu0 0.0
      %1321 = vmatpush1.msra.mxu0 0.0
      %1322 = vmatprep.subr.mxu0 0.0
      %1323 = vmatpush1.msra.mxu0 0.0
      %1324 = vmatprep.subr.mxu0 0.0
      %1325 = vmatpush1.msra.mxu0 0.0
      %1326 = vmatprep.subr.mxu0 0.0
      %1327 = vmatpush1.msra.mxu0 0.0
      %1328 = vmatprep.mubr.f32.mxu0 0.0
      %1329 = vmatmul.mubr.f32.gmra.mrb[0].mxu0 %v1259
      %v1330 = vpop.f32.mrb[0].mxu0
      %v1331 = vadd.f32 0.0, %v1330
      %v1332 = vpop.f32.mrb[0].mxu0
      %1333 = vmatprep.mubr.f32.mxu0 0.0
      %1334 = vmatmul.mubr.f32.gmra.mrb[0].mxu0 %v1262
      %v1335 = vpop.f32.mrb[0].mxu0
      %v1336 = vadd.f32 0.0, %v1335
      %v1337 = vpop.f32.mrb[0].mxu0
      %1338 = vdwg.mxu0
      %v1340 = vsel %vm856, %v1046, 0
      %v1343 = vsel %vm856, %v1051, 0
      %1345 = vmatprep.subr.mxu0 0.0
      %1346 = vmatpush1.msra.mxu0 %v846
      %1347 = vmatprep.subr.mxu0 0.0
      %1348 = vmatpush1.msra.mxu0 0.0
      %1349 = vmatprep.subr.mxu0 0.0
      %1350 = vmatpush1.msra.mxu0 0.0
      %1351 = vmatprep.subr.mxu0 0.0
      %1352 = vmatpush1.msra.mxu0 0.0
      %1353 = vmatprep.subr.mxu0 0.0
      %1354 = vmatpush1.msra.mxu0 0.0
      %1355 = vmatprep.subr.mxu0 0.0
      %1356 = vmatpush1.msra.mxu0 0.0
      %1357 = vmatprep.subr.mxu0 0.0
      %1358 = vmatpush1.msra.mxu0 0.0
      %1359 = vmatprep.subr.mxu0 0.0
      %1360 = vmatpush1.msra.mxu0 0.0
      %1361 = vmatprep.subr.mxu0 0.0
      %1362 = vmatpush1.msra.mxu0 0.0
      %1363 = vmatprep.subr.mxu0 0.0
      %1364 = vmatpush1.msra.mxu0 0.0
      %1365 = vmatprep.subr.mxu0 0.0
      %1366 = vmatpush1.msra.mxu0 0.0
      %1367 = vmatprep.subr.mxu0 0.0
      %1368 = vmatpush1.msra.mxu0 0.0
      %1369 = vmatprep.subr.mxu0 0.0
      %1370 = vmatpush1.msra.mxu0 0.0
      %1371 = vmatprep.subr.mxu0 0.0
      %1372 = vmatpush1.msra.mxu0 0.0
      %1373 = vmatprep.subr.mxu0 0.0
      %1374 = vmatpush1.msra.mxu0 0.0
      %1375 = vmatprep.subr.mxu0 0.0
      %1376 = vmatpush1.msra.mxu0 0.0
      %1377 = vmatprep.subr.mxu0 0.0
      %1378 = vmatpush1.msra.mxu0 0.0
      %1379 = vmatprep.subr.mxu0 0.0
      %1380 = vmatpush1.msra.mxu0 0.0
      %1381 = vmatprep.subr.mxu0 0.0
      %1382 = vmatpush1.msra.mxu0 0.0
      %1383 = vmatprep.subr.mxu0 0.0
      %1384 = vmatpush1.msra.mxu0 0.0
      %1385 = vmatprep.subr.mxu0 0.0
      %1386 = vmatpush1.msra.mxu0 0.0
      %1387 = vmatprep.subr.mxu0 0.0
      %1388 = vmatpush1.msra.mxu0 0.0
      %1389 = vmatprep.subr.mxu0 0.0
      %1390 = vmatpush1.msra.mxu0 0.0
      %1391 = vmatprep.subr.mxu0 0.0
      %1392 = vmatpush1.msra.mxu0 0.0
      %1393 = vmatprep.subr.mxu0 0.0
      %1394 = vmatpush1.msra.mxu0 0.0
      %1395 = vmatprep.subr.mxu0 0.0
      %1396 = vmatpush1.msra.mxu0 0.0
      %1397 = vmatprep.subr.mxu0 0.0
      %1398 = vmatpush1.msra.mxu0 0.0
      %1399 = vmatprep.subr.mxu0 0.0
      %1400 = vmatpush1.msra.mxu0 0.0
      %1401 = vmatprep.subr.mxu0 0.0
      %1402 = vmatpush1.msra.mxu0 0.0
      %1403 = vmatprep.subr.mxu0 0.0
      %1404 = vmatpush1.msra.mxu0 0.0
      %1405 = vmatprep.subr.mxu0 0.0
      %1406 = vmatpush1.msra.mxu0 0.0
      %1407 = vmatprep.subr.mxu0 0.0
      %1408 = vmatpush1.msra.mxu0 0.0
      %1409 = vmatprep.mubr.f32.mxu0 0.0
      %1410 = vmatmul.mubr.f32.gmra.mrb[0].mxu0 %v1340
      %v1411 = vpop.f32.mrb[0].mxu0
      %v1412 = vadd.f32 %v1331, %v1411
      %v1413 = vpop.f32.mrb[0].mxu0
      %1414 = vmatprep.mubr.f32.mxu0 0.0
      %1415 = vmatmul.mubr.f32.gmra.mrb[0].mxu0 %v1343
      %v1416 = vpop.f32.mrb[0].mxu0
      %v1417 = vadd.f32 %v1336, %v1416
      %v1418 = vpop.f32.mrb[0].mxu0
      %1419 = vdwg.mxu0
      %1420 = vrot.lane.b32.xlu0 %v838, 112
      %v1421 = vpop.permute.xlu0 %1420
      %1422 = vrot.lane.b32.xlu0 %v843, 112
      %v1423 = vpop.permute.xlu0 %1422
      %1424 = vrot.lane.b32.xlu0 %v838, 80
      %v1425 = vpop.permute.xlu0 %1424
      %1426 = vrot.lane.b32.xlu0 %v843, 80
      %v1427 = vpop.permute.xlu0 %1426
      %v1428 = vsel %vm856, %v1421, 0
      %v1430 = vsel %vm856, %v1423, 0
      %v1432 = vsel %vm856, %v1425, 0
      %v1434 = vsel %vm856, %v1427, 0
      %1436 = vmatprep.subr.mxu0 0.0
      %1437 = vmatpush1.xpose.msra.mxu0 %v1432
      %1438 = vmatprep.subr.mxu0 0.0
      %1439 = vmatpush1.xpose.msra.mxu0 %v1434
      %1440 = vmatprep.subr.mxu0 0.0
      %1441 = vmatpush1.xpose.msra.mxu0 0.0
      %1442 = vmatprep.subr.mxu0 0.0
      %1443 = vmatpush1.xpose.msra.mxu0 0.0
      %1444 = vmatprep.subr.mxu0 0.0
      %1445 = vmatpush1.xpose.msra.mxu0 0.0
      %1446 = vmatprep.subr.mxu0 0.0
      %1447 = vmatpush1.xpose.msra.mxu0 0.0
      %1448 = vmatprep.subr.mxu0 0.0
      %1449 = vmatpush1.xpose.msra.mxu0 0.0
      %1450 = vmatprep.subr.mxu0 0.0
      %1451 = vmatpush1.xpose.msra.mxu0 0.0
      %1452 = vmatprep.subr.mxu0 0.0
      %1453 = vmatpush1.xpose.msra.mxu0 0.0
      %1454 = vmatprep.subr.mxu0 0.0
      %1455 = vmatpush1.xpose.msra.mxu0 0.0
      %1456 = vmatprep.subr.mxu0 0.0
      %1457 = vmatpush1.xpose.msra.mxu0 0.0
      %1458 = vmatprep.subr.mxu0 0.0
      %1459 = vmatpush1.xpose.msra.mxu0 0.0
      %1460 = vmatprep.subr.mxu0 0.0
      %1461 = vmatpush1.xpose.msra.mxu0 0.0
      %1462 = vmatprep.subr.mxu0 0.0
      %1463 = vmatpush1.xpose.msra.mxu0 0.0
      %1464 = vmatprep.subr.mxu0 0.0
      %1465 = vmatpush1.xpose.msra.mxu0 0.0
      %1466 = vmatprep.subr.mxu0 0.0
      %1467 = vmatpush1.xpose.msra.mxu0 0.0
      %1468 = vmatprep.subr.mxu0 0.0
      %1469 = vmatpush1.xpose.msra.mxu0 0.0
      %1470 = vmatprep.subr.mxu0 0.0
      %1471 = vmatpush1.xpose.msra.mxu0 0.0
      %1472 = vmatprep.subr.mxu0 0.0
      %1473 = vmatpush1.xpose.msra.mxu0 0.0
      %1474 = vmatprep.subr.mxu0 0.0
      %1475 = vmatpush1.xpose.msra.mxu0 0.0
      %1476 = vmatprep.subr.mxu0 0.0
      %1477 = vmatpush1.xpose.msra.mxu0 0.0
      %1478 = vmatprep.subr.mxu0 0.0
      %1479 = vmatpush1.xpose.msra.mxu0 0.0
      %1480 = vmatprep.subr.mxu0 0.0
      %1481 = vmatpush1.xpose.msra.mxu0 0.0
      %1482 = vmatprep.subr.mxu0 0.0
      %1483 = vmatpush1.xpose.msra.mxu0 0.0
      %1484 = vmatprep.subr.mxu0 0.0
      %1485 = vmatpush1.xpose.msra.mxu0 0.0
      %1486 = vmatprep.subr.mxu0 0.0
      %1487 = vmatpush1.xpose.msra.mxu0 0.0
      %1488 = vmatprep.subr.mxu0 0.0
      %1489 = vmatpush1.xpose.msra.mxu0 0.0
      %1490 = vmatprep.subr.mxu0 0.0
      %1491 = vmatpush1.xpose.msra.mxu0 0.0
      %1492 = vmatprep.subr.mxu0 0.0
      %1493 = vmatpush1.xpose.msra.mxu0 0.0
      %1494 = vmatprep.subr.mxu0 0.0
      %1495 = vmatpush1.xpose.msra.mxu0 0.0
      %1496 = vmatprep.subr.mxu0 0.0
      %1497 = vmatpush1.xpose.msra.mxu0 0.0
      %1498 = vmatprep.subr.mxu0 0.0
      %1499 = vmatpush1.xpose.msra.mxu0 0.0
      %1500 = vmatprep.mubr.f32.mxu0 0.0
      %1501 = vmatmul.mubr.f32.gmra.mrb[0].mxu0 %v1428
      %v1502 = vpop.f32.mrb[0].mxu0
      %v1503 = vadd.f32 0.0, %v1502
      %v1504 = vpop.f32.mrb[0].mxu0
      %1505 = vmatprep.mubr.f32.mxu0 0.0
      %1506 = vmatmul.mubr.f32.gmra.mrb[0].mxu0 %v1430
      %v1507 = vpop.f32.mrb[0].mxu0
      %v1508 = vadd.f32 0.0, %v1507
      %v1509 = vpop.f32.mrb[0].mxu0
      %1510 = vdwg.mxu0
      %v1511 = vmul.f32 %v1503, 0.35355338
      %v1512 = vmul.f32 %v1508, 0.35355338
      %v1513 = vadd.f32 %v1511, %v751
      %v1514 = vadd.f32 %v1512, %v752
      %v1515 = vsel %vm944, %v1513, -inf
      %1516 = vmax.xlane.f32.xlu0 %v1515
      %v1517 = vpop.xlane.xlu0 %1516
      %v1518 = vsel %vm944, %v1514, -inf
      %1519 = vmax.xlane.f32.xlu0 %v1518
      %v1520 = vpop.xlane.xlu0 %1519
      %v1521 = vsub.f32 %v1513, %v1517
      %v1522 = vsub.f32 %v1514, %v1520
      %v1523 = vmul.f32 %v1521, 1.442695
      %v1524 = vpow.pop %v1523
      %v1525 = vmul.f32 %v1522, 1.442695
      %v1526 = vpow.pop %v1525
      %v1527 = vsel %vm944, %v1524, 0.0
      %1528 = vadd.xlane.f32.xlu0 %v1527
      %v1529 = vpop.xlane.xlu0 %1528
      %v1530 = vsel %vm944, %v1526, 0.0
      %1531 = vadd.xlane.f32.xlu0 %v1530
      %v1532 = vpop.xlane.xlu0 %1531
      %v1533 = vrcp.pop %v1529
      %v1534 = vrcp.pop %v1532
      %v1535 = vmul.f32 %v1524, %v1533
      %v1536 = vmul.f32 %v1526, %v1534
      %1537 = vrot.lane.b32.xlu0 %v838, 48
      %v1538 = vpop.permute.xlu0 %1537
      %1539 = vrot.lane.b32.xlu0 %v843, 48
      %v1540 = vpop.permute.xlu0 %1539
      %v1544 = vsel %vm944, %v1535, 0
      %v1547 = vsel %vm944, %v1536, 0
      %1549 = vmatprep.subr.mxu0 0.0
      %1550 = vmatpush1.msra.mxu0 %v1538
      %1551 = vmatprep.subr.mxu0 0.0
      %1552 = vmatpush1.msra.mxu0 %v1540
      %1553 = vmatprep.subr.mxu0 0.0
      %1554 = vmatpush1.msra.mxu0 0.0
      %1555 = vmatprep.subr.mxu0 0.0
      %1556 = vmatpush1.msra.mxu0 0.0
      %1557 = vmatprep.subr.mxu0 0.0
      %1558 = vmatpush1.msra.mxu0 0.0
      %1559 = vmatprep.subr.mxu0 0.0
      %1560 = vmatpush1.msra.mxu0 0.0
      %1561 = vmatprep.subr.mxu0 0.0
      %1562 = vmatpush1.msra.mxu0 0.0
      %1563 = vmatprep.subr.mxu0 0.0
      %1564 = vmatpush1.msra.mxu0 0.0
      %1565 = vmatprep.subr.mxu0 0.0
      %1566 = vmatpush1.msra.mxu0 0.0
      %1567 = vmatprep.subr.mxu0 0.0
      %1568 = vmatpush1.msra.mxu0 0.0
      %1569 = vmatprep.subr.mxu0 0.0
      %1570 = vmatpush1.msra.mxu0 0.0
      %1571 = vmatprep.subr.mxu0 0.0
      %1572 = vmatpush1.msra.mxu0 0.0
      %1573 = vmatprep.subr.mxu0 0.0
      %1574 = vmatpush1.msra.mxu0 0.0
      %1575 = vmatprep.subr.mxu0 0.0
      %1576 = vmatpush1.msra.mxu0 0.0
      %1577 = vmatprep.subr.mxu0 0.0
      %1578 = vmatpush1.msra.mxu0 0.0
      %1579 = vmatprep.subr.mxu0 0.0
      %1580 = vmatpush1.msra.mxu0 0.0
      %1581 = vmatprep.subr.mxu0 0.0
      %1582 = vmatpush1.msra.mxu0 0.0
      %1583 = vmatprep.subr.mxu0 0.0
      %1584 = vmatpush1.msra.mxu0 0.0
      %1585 = vmatprep.subr.mxu0 0.0
      %1586 = vmatpush1.msra.mxu0 0.0
      %1587 = vmatprep.subr.mxu0 0.0
      %1588 = vmatpush1.msra.mxu0 0.0
      %1589 = vmatprep.subr.mxu0 0.0
      %1590 = vmatpush1.msra.mxu0 0.0
      %1591 = vmatprep.subr.mxu0 0.0
      %1592 = vmatpush1.msra.mxu0 0.0
      %1593 = vmatprep.subr.mxu0 0.0
      %1594 = vmatpush1.msra.mxu0 0.0
      %1595 = vmatprep.subr.mxu0 0.0
      %1596 = vmatpush1.msra.mxu0 0.0
      %1597 = vmatprep.subr.mxu0 0.0
      %1598 = vmatpush1.msra.mxu0 0.0
      %1599 = vmatprep.subr.mxu0 0.0
      %1600 = vmatpush1.msra.mxu0 0.0
      %1601 = vmatprep.subr.mxu0 0.0
      %1602 = vmatpush1.msra.mxu0 0.0
      %1603 = vmatprep.subr.mxu0 0.0
      %1604 = vmatpush1.msra.mxu0 0.0
      %1605 = vmatprep.subr.mxu0 0.0
      %1606 = vmatpush1.msra.mxu0 0.0
      %1607 = vmatprep.subr.mxu0 0.0
      %1608 = vmatpush1.msra.mxu0 0.0
      %1609 = vmatprep.subr.mxu0 0.0
      %1610 = vmatpush1.msra.mxu0 0.0
      %1611 = vmatprep.subr.mxu0 0.0
      %1612 = vmatpush1.msra.mxu0 0.0
      %1613 = vmatprep.mubr.f32.mxu0 0.0
      %1614 = vmatmul.mubr.f32.gmra.mrb[0].mxu0 %v1544
      %v1615 = vpop.f32.mrb[0].mxu0
      %v1616 = vadd.f32 0.0, %v1615
      %v1617 = vpop.f32.mrb[0].mxu0
      %1618 = vmatprep.mubr.f32.mxu0 0.0
      %1619 = vmatmul.mubr.f32.gmra.mrb[0].mxu0 %v1547
      %v1620 = vpop.f32.mrb[0].mxu0
      %v1621 = vadd.f32 0.0, %v1620
      %v1622 = vpop.f32.mrb[0].mxu0
      %1623 = vdwg.mxu0
      %v1625 = vsel %vm856, %v1616, 0
      %v1628 = vsel %vm856, %v1621, 0
      %1630 = vmatprep.subr.mxu0 0.0
      %1631 = vmatpush1.msra.mxu0 %v848
      %1632 = vmatprep.subr.mxu0 0.0
      %1633 = vmatpush1.msra.mxu0 0.0
      %1634 = vmatprep.subr.mxu0 0.0
      %1635 = vmatpush1.msra.mxu0 0.0
      %1636 = vmatprep.subr.mxu0 0.0
      %1637 = vmatpush1.msra.mxu0 0.0
      %1638 = vmatprep.subr.mxu0 0.0
      %1639 = vmatpush1.msra.mxu0 0.0
      %1640 = vmatprep.subr.mxu0 0.0
      %1641 = vmatpush1.msra.mxu0 0.0
      %1642 = vmatprep.subr.mxu0 0.0
      %1643 = vmatpush1.msra.mxu0 0.0
      %1644 = vmatprep.subr.mxu0 0.0
      %1645 = vmatpush1.msra.mxu0 0.0
      %1646 = vmatprep.subr.mxu0 0.0
      %1647 = vmatpush1.msra.mxu0 0.0
      %1648 = vmatprep.subr.mxu0 0.0
      %1649 = vmatpush1.msra.mxu0 0.0
      %1650 = vmatprep.subr.mxu0 0.0
      %1651 = vmatpush1.msra.mxu0 0.0
      %1652 = vmatprep.subr.mxu0 0.0
      %1653 = vmatpush1.msra.mxu0 0.0
      %1654 = vmatprep.subr.mxu0 0.0
      %1655 = vmatpush1.msra.mxu0 0.0
      %1656 = vmatprep.subr.mxu0 0.0
      %1657 = vmatpush1.msra.mxu0 0.0
      %1658 = vmatprep.subr.mxu0 0.0
      %1659 = vmatpush1.msra.mxu0 0.0
      %1660 = vmatprep.subr.mxu0 0.0
      %1661 = vmatpush1.msra.mxu0 0.0
      %1662 = vmatprep.subr.mxu0 0.0
      %1663 = vmatpush1.msra.mxu0 0.0
      %1664 = vmatprep.subr.mxu0 0.0
      %1665 = vmatpush1.msra.mxu0 0.0
      %1666 = vmatprep.subr.mxu0 0.0
      %1667 = vmatpush1.msra.mxu0 0.0
      %1668 = vmatprep.subr.mxu0 0.0
      %1669 = vmatpush1.msra.mxu0 0.0
      %1670 = vmatprep.subr.mxu0 0.0
      %1671 = vmatpush1.msra.mxu0 0.0
      %1672 = vmatprep.subr.mxu0 0.0
      %1673 = vmatpush1.msra.mxu0 0.0
      %1674 = vmatprep.subr.mxu0 0.0
      %1675 = vmatpush1.msra.mxu0 0.0
      %1676 = vmatprep.subr.mxu0 0.0
      %1677 = vmatpush1.msra.mxu0 0.0
      %1678 = vmatprep.subr.mxu0 0.0
      %1679 = vmatpush1.msra.mxu0 0.0
      %1680 = vmatprep.subr.mxu0 0.0
      %1681 = vmatpush1.msra.mxu0 0.0
      %1682 = vmatprep.subr.mxu0 0.0
      %1683 = vmatpush1.msra.mxu0 0.0
      %1684 = vmatprep.subr.mxu0 0.0
      %1685 = vmatpush1.msra.mxu0 0.0
      %1686 = vmatprep.subr.mxu0 0.0
      %1687 = vmatpush1.msra.mxu0 0.0
      %1688 = vmatprep.subr.mxu0 0.0
      %1689 = vmatpush1.msra.mxu0 0.0
      %1690 = vmatprep.subr.mxu0 0.0
      %1691 = vmatpush1.msra.mxu0 0.0
      %1692 = vmatprep.subr.mxu0 0.0
      %1693 = vmatpush1.msra.mxu0 0.0
      %1694 = vmatprep.mubr.f32.mxu0 0.0
      %1695 = vmatmul.mubr.f32.gmra.mrb[0].mxu0 %v1625
      %v1696 = vpop.f32.mrb[0].mxu0
      %v1697 = vadd.f32 0.0, %v1696
      %v1698 = vpop.f32.mrb[0].mxu0
      %1699 = vmatprep.mubr.f32.mxu0 0.0
      %1700 = vmatmul.mubr.f32.gmra.mrb[0].mxu0 %v1628
      %v1701 = vpop.f32.mrb[0].mxu0
      %v1702 = vadd.f32 0.0, %v1701
      %v1703 = vpop.f32.mrb[0].mxu0
      %1704 = vdwg.mxu0
      %v1705 = vadd.f32 %v1412, %v1697
      %v1706 = vadd.f32 %v1417, %v1702
      %1707 = vrot.lane.b32.xlu0 %v838, 104
      %v1708 = vpop.permute.xlu0 %1707
      %1709 = vrot.lane.b32.xlu0 %v843, 104
      %v1710 = vpop.permute.xlu0 %1709
      %1711 = vrot.lane.b32.xlu0 %v838, 72
      %v1712 = vpop.permute.xlu0 %1711
      %1713 = vrot.lane.b32.xlu0 %v843, 72
      %v1714 = vpop.permute.xlu0 %1713
      %v1715 = vsel %vm856, %v1708, 0
      %v1717 = vsel %vm856, %v1710, 0
      %v1719 = vsel %vm856, %v1712, 0
      %v1721 = vsel %vm856, %v1714, 0
      %1723 = vmatprep.subr.mxu0 0.0
      %1724 = vmatpush1.xpose.msra.mxu0 %v1719
      %1725 = vmatprep.subr.mxu0 0.0
      %1726 = vmatpush1.xpose.msra.mxu0 %v1721
      %1727 = vmatprep.subr.mxu0 0.0
      %1728 = vmatpush1.xpose.msra.mxu0 0.0
      %1729 = vmatprep.subr.mxu0 0.0
      %1730 = vmatpush1.xpose.msra.mxu0 0.0
      %1731 = vmatprep.subr.mxu0 0.0
      %1732 = vmatpush1.xpose.msra.mxu0 0.0
      %1733 = vmatprep.subr.mxu0 0.0
      %1734 = vmatpush1.xpose.msra.mxu0 0.0
      %1735 = vmatprep.subr.mxu0 0.0
      %1736 = vmatpush1.xpose.msra.mxu0 0.0
      %1737 = vmatprep.subr.mxu0 0.0
      %1738 = vmatpush1.xpose.msra.mxu0 0.0
      %1739 = vmatprep.subr.mxu0 0.0
      %1740 = vmatpush1.xpose.msra.mxu0 0.0
      %1741 = vmatprep.subr.mxu0 0.0
      %1742 = vmatpush1.xpose.msra.mxu0 0.0
      %1743 = vmatprep.subr.mxu0 0.0
      %1744 = vmatpush1.xpose.msra.mxu0 0.0
      %1745 = vmatprep.subr.mxu0 0.0
      %1746 = vmatpush1.xpose.msra.mxu0 0.0
      %1747 = vmatprep.subr.mxu0 0.0
      %1748 = vmatpush1.xpose.msra.mxu0 0.0
      %1749 = vmatprep.subr.mxu0 0.0
      %1750 = vmatpush1.xpose.msra.mxu0 0.0
      %1751 = vmatprep.subr.mxu0 0.0
      %1752 = vmatpush1.xpose.msra.mxu0 0.0
      %1753 = vmatprep.subr.mxu0 0.0
      %1754 = vmatpush1.xpose.msra.mxu0 0.0
      %1755 = vmatprep.subr.mxu0 0.0
      %1756 = vmatpush1.xpose.msra.mxu0 0.0
      %1757 = vmatprep.subr.mxu0 0.0
      %1758 = vmatpush1.xpose.msra.mxu0 0.0
      %1759 = vmatprep.subr.mxu0 0.0
      %1760 = vmatpush1.xpose.msra.mxu0 0.0
      %1761 = vmatprep.subr.mxu0 0.0
      %1762 = vmatpush1.xpose.msra.mxu0 0.0
      %1763 = vmatprep.subr.mxu0 0.0
      %1764 = vmatpush1.xpose.msra.mxu0 0.0
      %1765 = vmatprep.subr.mxu0 0.0
      %1766 = vmatpush1.xpose.msra.mxu0 0.0
      %1767 = vmatprep.subr.mxu0 0.0
      %1768 = vmatpush1.xpose.msra.mxu0 0.0
      %1769 = vmatprep.subr.mxu0 0.0
      %1770 = vmatpush1.xpose.msra.mxu0 0.0
      %1771 = vmatprep.subr.mxu0 0.0
      %1772 = vmatpush1.xpose.msra.mxu0 0.0
      %1773 = vmatprep.subr.mxu0 0.0
      %1774 = vmatpush1.xpose.msra.mxu0 0.0
      %1775 = vmatprep.subr.mxu0 0.0
      %1776 = vmatpush1.xpose.msra.mxu0 0.0
      %1777 = vmatprep.subr.mxu0 0.0
      %1778 = vmatpush1.xpose.msra.mxu0 0.0
      %1779 = vmatprep.subr.mxu0 0.0
      %1780 = vmatpush1.xpose.msra.mxu0 0.0
      %1781 = vmatprep.subr.mxu0 0.0
      %1782 = vmatpush1.xpose.msra.mxu0 0.0
      %1783 = vmatprep.subr.mxu0 0.0
      %1784 = vmatpush1.xpose.msra.mxu0 0.0
      %1785 = vmatprep.subr.mxu0 0.0
      %1786 = vmatpush1.xpose.msra.mxu0 0.0
      %1787 = vmatprep.mubr.f32.mxu0 0.0
      %1788 = vmatmul.mubr.f32.gmra.mrb[0].mxu0 %v1715
      %v1789 = vpop.f32.mrb[0].mxu0
      %v1790 = vadd.f32 0.0, %v1789
      %v1791 = vpop.f32.mrb[0].mxu0
      %1792 = vmatprep.mubr.f32.mxu0 0.0
      %1793 = vmatmul.mubr.f32.gmra.mrb[0].mxu0 %v1717
      %v1794 = vpop.f32.mrb[0].mxu0
      %v1795 = vadd.f32 0.0, %v1794
      %v1796 = vpop.f32.mrb[0].mxu0
      %1797 = vdwg.mxu0
      %v1798 = vmul.f32 %v1790, 0.35355338
      %v1799 = vmul.f32 %v1795, 0.35355338
      %v1800 = vadd.f32 %v1798, %v751
      %v1801 = vadd.f32 %v1799, %v752
      %v1802 = vsel %vm944, %v1800, -inf
      %1803 = vmax.xlane.f32.xlu0 %v1802
      %v1804 = vpop.xlane.xlu0 %1803
      %v1805 = vsel %vm944, %v1801, -inf
      %1806 = vmax.xlane.f32.xlu0 %v1805
      %v1807 = vpop.xlane.xlu0 %1806
      %v1808 = vsub.f32 %v1800, %v1804
      %v1809 = vsub.f32 %v1801, %v1807
      %v1810 = vmul.f32 %v1808, 1.442695
      %v1811 = vpow.pop %v1810
      %v1812 = vmul.f32 %v1809, 1.442695
      %v1813 = vpow.pop %v1812
      %v1814 = vsel %vm944, %v1811, 0.0
      %1815 = vadd.xlane.f32.xlu0 %v1814
      %v1816 = vpop.xlane.xlu0 %1815
      %v1817 = vsel %vm944, %v1813, 0.0
      %1818 = vadd.xlane.f32.xlu0 %v1817
      %v1819 = vpop.xlane.xlu0 %1818
      %v1820 = vrcp.pop %v1816
      %v1821 = vrcp.pop %v1819
      %v1822 = vmul.f32 %v1811, %v1820
      %v1823 = vmul.f32 %v1813, %v1821
      %1824 = vrot.lane.b32.xlu0 %v838, 40
      %v1825 = vpop.permute.xlu0 %1824
      %1826 = vrot.lane.b32.xlu0 %v843, 40
      %v1827 = vpop.permute.xlu0 %1826
      %v1831 = vsel %vm944, %v1822, 0
      %v1834 = vsel %vm944, %v1823, 0
      %1836 = vmatprep.subr.mxu0 0.0
      %1837 = vmatpush1.msra.mxu0 %v1825
      %1838 = vmatprep.subr.mxu0 0.0
      %1839 = vmatpush1.msra.mxu0 %v1827
      %1840 = vmatprep.subr.mxu0 0.0
      %1841 = vmatpush1.msra.mxu0 0.0
      %1842 = vmatprep.subr.mxu0 0.0
      %1843 = vmatpush1.msra.mxu0 0.0
      %1844 = vmatprep.subr.mxu0 0.0
      %1845 = vmatpush1.msra.mxu0 0.0
      %1846 = vmatprep.subr.mxu0 0.0
      %1847 = vmatpush1.msra.mxu0 0.0
      %1848 = vmatprep.subr.mxu0 0.0
      %1849 = vmatpush1.msra.mxu0 0.0
      %1850 = vmatprep.subr.mxu0 0.0
      %1851 = vmatpush1.msra.mxu0 0.0
      %1852 = vmatprep.subr.mxu0 0.0
      %1853 = vmatpush1.msra.mxu0 0.0
      %1854 = vmatprep.subr.mxu0 0.0
      %1855 = vmatpush1.msra.mxu0 0.0
      %1856 = vmatprep.subr.mxu0 0.0
      %1857 = vmatpush1.msra.mxu0 0.0
      %1858 = vmatprep.subr.mxu0 0.0
      %1859 = vmatpush1.msra.mxu0 0.0
      %1860 = vmatprep.subr.mxu0 0.0
      %1861 = vmatpush1.msra.mxu0 0.0
      %1862 = vmatprep.subr.mxu0 0.0
      %1863 = vmatpush1.msra.mxu0 0.0
      %1864 = vmatprep.subr.mxu0 0.0
      %1865 = vmatpush1.msra.mxu0 0.0
      %1866 = vmatprep.subr.mxu0 0.0
      %1867 = vmatpush1.msra.mxu0 0.0
      %1868 = vmatprep.subr.mxu0 0.0
      %1869 = vmatpush1.msra.mxu0 0.0
      %1870 = vmatprep.subr.mxu0 0.0
      %1871 = vmatpush1.msra.mxu0 0.0
      %1872 = vmatprep.subr.mxu0 0.0
      %1873 = vmatpush1.msra.mxu0 0.0
      %1874 = vmatprep.subr.mxu0 0.0
      %1875 = vmatpush1.msra.mxu0 0.0
      %1876 = vmatprep.subr.mxu0 0.0
      %1877 = vmatpush1.msra.mxu0 0.0
      %1878 = vmatprep.subr.mxu0 0.0
      %1879 = vmatpush1.msra.mxu0 0.0
      %1880 = vmatprep.subr.mxu0 0.0
      %1881 = vmatpush1.msra.mxu0 0.0
      %1882 = vmatprep.subr.mxu0 0.0
      %1883 = vmatpush1.msra.mxu0 0.0
      %1884 = vmatprep.subr.mxu0 0.0
      %1885 = vmatpush1.msra.mxu0 0.0
      %1886 = vmatprep.subr.mxu0 0.0
      %1887 = vmatpush1.msra.mxu0 0.0
      %1888 = vmatprep.subr.mxu0 0.0
      %1889 = vmatpush1.msra.mxu0 0.0
      %1890 = vmatprep.subr.mxu0 0.0
      %1891 = vmatpush1.msra.mxu0 0.0
      %1892 = vmatprep.subr.mxu0 0.0
      %1893 = vmatpush1.msra.mxu0 0.0
      %1894 = vmatprep.subr.mxu0 0.0
      %1895 = vmatpush1.msra.mxu0 0.0
      %1896 = vmatprep.subr.mxu0 0.0
      %1897 = vmatpush1.msra.mxu0 0.0
      %1898 = vmatprep.subr.mxu0 0.0
      %1899 = vmatpush1.msra.mxu0 0.0
      %1900 = vmatprep.mubr.f32.mxu0 0.0
      %1901 = vmatmul.mubr.f32.gmra.mrb[0].mxu0 %v1831
      %v1902 = vpop.f32.mrb[0].mxu0
      %v1903 = vadd.f32 0.0, %v1902
      %v1904 = vpop.f32.mrb[0].mxu0
      %1905 = vmatprep.mubr.f32.mxu0 0.0
      %1906 = vmatmul.mubr.f32.gmra.mrb[0].mxu0 %v1834
      %v1907 = vpop.f32.mrb[0].mxu0
      %v1908 = vadd.f32 0.0, %v1907
      %v1909 = vpop.f32.mrb[0].mxu0
      %1910 = vdwg.mxu0
      %v1912 = vsel %vm856, %v1903, 0
      %v1915 = vsel %vm856, %v1908, 0
      %1917 = vmatprep.subr.mxu0 0.0
      %1918 = vmatpush1.msra.mxu0 %v849
      %1919 = vmatprep.subr.mxu0 0.0
      %1920 = vmatpush1.msra.mxu0 0.0
      %1921 = vmatprep.subr.mxu0 0.0
      %1922 = vmatpush1.msra.mxu0 0.0
      %1923 = vmatprep.subr.mxu0 0.0
      %1924 = vmatpush1.msra.mxu0 0.0
      %1925 = vmatprep.subr.mxu0 0.0
      %1926 = vmatpush1.msra.mxu0 0.0
      %1927 = vmatprep.subr.mxu0 0.0
      %1928 = vmatpush1.msra.mxu0 0.0
      %1929 = vmatprep.subr.mxu0 0.0
      %1930 = vmatpush1.msra.mxu0 0.0
      %1931 = vmatprep.subr.mxu0 0.0
      %1932 = vmatpush1.msra.mxu0 0.0
      %1933 = vmatprep.subr.mxu0 0.0
      %1934 = vmatpush1.msra.mxu0 0.0
      %1935 = vmatprep.subr.mxu0 0.0
      %1936 = vmatpush1.msra.mxu0 0.0
      %1937 = vmatprep.subr.mxu0 0.0
      %1938 = vmatpush1.msra.mxu0 0.0
      %1939 = vmatprep.subr.mxu0 0.0
      %1940 = vmatpush1.msra.mxu0 0.0
      %1941 = vmatprep.subr.mxu0 0.0
      %1942 = vmatpush1.msra.mxu0 0.0
      %1943 = vmatprep.subr.mxu0 0.0
      %1944 = vmatpush1.msra.mxu0 0.0
      %1945 = vmatprep.subr.mxu0 0.0
      %1946 = vmatpush1.msra.mxu0 0.0
      %1947 = vmatprep.subr.mxu0 0.0
      %1948 = vmatpush1.msra.mxu0 0.0
      %1949 = vmatprep.subr.mxu0 0.0
      %1950 = vmatpush1.msra.mxu0 0.0
      %1951 = vmatprep.subr.mxu0 0.0
      %1952 = vmatpush1.msra.mxu0 0.0
      %1953 = vmatprep.subr.mxu0 0.0
      %1954 = vmatpush1.msra.mxu0 0.0
      %1955 = vmatprep.subr.mxu0 0.0
      %1956 = vmatpush1.msra.mxu0 0.0
      %1957 = vmatprep.subr.mxu0 0.0
      %1958 = vmatpush1.msra.mxu0 0.0
      %1959 = vmatprep.subr.mxu0 0.0
      %1960 = vmatpush1.msra.mxu0 0.0
      %1961 = vmatprep.subr.mxu0 0.0
      %1962 = vmatpush1.msra.mxu0 0.0
      %1963 = vmatprep.subr.mxu0 0.0
      %1964 = vmatpush1.msra.mxu0 0.0
      %1965 = vmatprep.subr.mxu0 0.0
      %1966 = vmatpush1.msra.mxu0 0.0
      %1967 = vmatprep.subr.mxu0 0.0
      %1968 = vmatpush1.msra.mxu0 0.0
      %1969 = vmatprep.subr.mxu0 0.0
      %1970 = vmatpush1.msra.mxu0 0.0
      %1971 = vmatprep.subr.mxu0 0.0
      %1972 = vmatpush1.msra.mxu0 0.0
      %1973 = vmatprep.subr.mxu0 0.0
      %1974 = vmatpush1.msra.mxu0 0.0
      %1975 = vmatprep.subr.mxu0 0.0
      %1976 = vmatpush1.msra.mxu0 0.0
      %1977 = vmatprep.subr.mxu0 0.0
      %1978 = vmatpush1.msra.mxu0 0.0
      %1979 = vmatprep.subr.mxu0 0.0
      %1980 = vmatpush1.msra.mxu0 0.0
      %1981 = vmatprep.mubr.f32.mxu0 0.0
      %1982 = vmatmul.mubr.f32.gmra.mrb[0].mxu0 %v1912
      %v1983 = vpop.f32.mrb[0].mxu0
      %v1984 = vadd.f32 0.0, %v1983
      %v1985 = vpop.f32.mrb[0].mxu0
      %1986 = vmatprep.mubr.f32.mxu0 0.0
      %1987 = vmatmul.mubr.f32.gmra.mrb[0].mxu0 %v1915
      %v1988 = vpop.f32.mrb[0].mxu0
      %v1989 = vadd.f32 0.0, %v1988
      %v1990 = vpop.f32.mrb[0].mxu0
      %1991 = vdwg.mxu0
      %v1992 = vadd.f32 %v1705, %v1984
      %v1993 = vadd.f32 %v1706, %v1989
      %v1994 = vld [vmem:[%s711] sm:$0x1]
      %v1996 = vlaneseq
      %v1997 = vshrl.u32 %v1996, 7
      %v1998 = vsub.s32 0, %v1997
      %v1999 = vrot.slane %v1994, %v1998
      %v2001 = vadd.f32 %v1992, %v1999
      %v2002 = vadd.f32 %v1993, %v1999
      %v2003 = vadd.f32 %v749, %v2001
      %v2004 = vadd.f32 %v750, %v2002
      %v2005 = vld [vmem:[%s714] sm:$0x1]
      %v2006 = vld [vmem:[%s717] sm:$0x1]
      %v2007 = vsel %vm764, %v2003, 0.0
      %2008 = vadd.xlane.f32.xlu0 %v2007
      %v2009 = vpop.xlane.xlu0 %2008
      %v2010 = vsel %vm764, %v2004, 0.0
      %2011 = vadd.xlane.f32.xlu0 %v2010
      %v2012 = vpop.xlane.xlu0 %2011
      %v2013 = vrcp.pop 32.0
      %v2014 = vmul.f32 %v2009, %v2013
      %v2015 = vmul.f32 %v2012, %v2013
      %v2016 = vsub.f32 %v2003, %v2014
      %v2017 = vsub.f32 %v2004, %v2015
      %v2018 = vmul.f32 %v2016, %v2016
      %v2019 = vmul.f32 %v2017, %v2017
      %v2020 = vsel %vm764, %v2018, 0.0
      %2021 = vadd.xlane.f32.xlu0 %v2020
      %v2022 = vpop.xlane.xlu0 %2021
      %v2023 = vsel %vm764, %v2019, 0.0
      %2024 = vadd.xlane.f32.xlu0 %v2023
      %v2025 = vpop.xlane.xlu0 %2024
      %v2026 = vmul.f32 %v2022, %v2013
      %v2027 = vmul.f32 %v2025, %v2013
      %v2028 = vadd.f32 %v2026, 1e-05
      %v2029 = vadd.f32 %v2027, 1e-05
      %v2030 = vrsqrt.pop %v2028
      %v2031 = vrsqrt.pop %v2029
      %v2032 = vmul.f32 %v2016, %v2030
      %v2033 = vmul.f32 %v2017, %v2031
      %v2035 = vlaneseq
      %v2036 = vshrl.u32 %v2035, 7
      %v2037 = vsub.s32 0, %v2036
      %v2038 = vrot.slane %v2005, %v2037
      %v2040 = vmul.f32 %v2032, %v2038
      %v2041 = vmul.f32 %v2033, %v2038
      %v2043 = vlaneseq
      %v2044 = vshrl.u32 %v2043, 7
      %v2045 = vsub.s32 0, %v2044
      %v2046 = vrot.slane %v2006, %v2045
      %v2048 = vadd.f32 %v2040, %v2046
      %v2049 = vadd.f32 %v2041, %v2046
      %v2050 = vld [vmem:[%s722] sm:$0xff]
      %v2051 = vld [vmem:[%s722 + $0x8] sm:$0xff]
      %v2052 = vld [vmem:[%s722 + $0x10] sm:$0xff]
      %v2053 = vld [vmem:[%s722 + $0x18] sm:$0xff]
      %v2054 = vld [vmem:[%s725] sm:$0x1]
      %v2056 = vlaneseq
      %v2057 = vshrl.u32 %v2056, 7
      %v2058 = vsub.s32 0, %v2057
      %v2059 = vrot.slane %v2054, %v2058
      %v2062 = vsel %vm764, %v2048, 0
      %v2065 = vsel %vm764, %v2049, 0
      %2067 = vmatprep.subr.mxu0 0.0
      %2068 = vmatpush1.msra.mxu0 %v2050
      %2069 = vmatprep.subr.mxu0 0.0
      %2070 = vmatpush1.msra.mxu0 %v2051
      %2071 = vmatprep.subr.mxu0 0.0
      %2072 = vmatpush1.msra.mxu0 %v2052
      %2073 = vmatprep.subr.mxu0 0.0
      %2074 = vmatpush1.msra.mxu0 %v2053
      %2075 = vmatprep.subr.mxu0 0.0
      %2076 = vmatpush1.msra.mxu0 0.0
      %2077 = vmatprep.subr.mxu0 0.0
      %2078 = vmatpush1.msra.mxu0 0.0
      %2079 = vmatprep.subr.mxu0 0.0
      %2080 = vmatpush1.msra.mxu0 0.0
      %2081 = vmatprep.subr.mxu0 0.0
      %2082 = vmatpush1.msra.mxu0 0.0
      %2083 = vmatprep.subr.mxu0 0.0
      %2084 = vmatpush1.msra.mxu0 0.0
      %2085 = vmatprep.subr.mxu0 0.0
      %2086 = vmatpush1.msra.mxu0 0.0
      %2087 = vmatprep.subr.mxu0 0.0
      %2088 = vmatpush1.msra.mxu0 0.0
      %2089 = vmatprep.subr.mxu0 0.0
      %2090 = vmatpush1.msra.mxu0 0.0
      %2091 = vmatprep.subr.mxu0 0.0
      %2092 = vmatpush1.msra.mxu0 0.0
      %2093 = vmatprep.subr.mxu0 0.0
      %2094 = vmatpush1.msra.mxu0 0.0
      %2095 = vmatprep.subr.mxu0 0.0
      %2096 = vmatpush1.msra.mxu0 0.0
      %2097 = vmatprep.subr.mxu0 0.0
      %2098 = vmatpush1.msra.mxu0 0.0
      %2099 = vmatprep.subr.mxu0 0.0
      %2100 = vmatpush1.msra.mxu0 0.0
      %2101 = vmatprep.subr.mxu0 0.0
      %2102 = vmatpush1.msra.mxu0 0.0
      %2103 = vmatprep.subr.mxu0 0.0
      %2104 = vmatpush1.msra.mxu0 0.0
      %2105 = vmatprep.subr.mxu0 0.0
      %2106 = vmatpush1.msra.mxu0 0.0
      %2107 = vmatprep.subr.mxu0 0.0
      %2108 = vmatpush1.msra.mxu0 0.0
      %2109 = vmatprep.subr.mxu0 0.0
      %2110 = vmatpush1.msra.mxu0 0.0
      %2111 = vmatprep.subr.mxu0 0.0
      %2112 = vmatpush1.msra.mxu0 0.0
      %2113 = vmatprep.subr.mxu0 0.0
      %2114 = vmatpush1.msra.mxu0 0.0
      %2115 = vmatprep.subr.mxu0 0.0
      %2116 = vmatpush1.msra.mxu0 0.0
      %2117 = vmatprep.subr.mxu0 0.0
      %2118 = vmatpush1.msra.mxu0 0.0
      %2119 = vmatprep.subr.mxu0 0.0
      %2120 = vmatpush1.msra.mxu0 0.0
      %2121 = vmatprep.subr.mxu0 0.0
      %2122 = vmatpush1.msra.mxu0 0.0
      %2123 = vmatprep.subr.mxu0 0.0
      %2124 = vmatpush1.msra.mxu0 0.0
      %2125 = vmatprep.subr.mxu0 0.0
      %2126 = vmatpush1.msra.mxu0 0.0
      %2127 = vmatprep.subr.mxu0 0.0
      %2128 = vmatpush1.msra.mxu0 0.0
      %2129 = vmatprep.subr.mxu0 0.0
      %2130 = vmatpush1.msra.mxu0 0.0
      %2131 = vmatprep.mubr.f32.mxu0 0.0
      %2132 = vmatmul.mubr.f32.gmra.mrb[0].mxu0 %v2062
      %v2133 = vpop.f32.mrb[0].mxu0
      %v2134 = vadd.f32 %v2059, %v2133
      %v2135 = vpop.f32.mrb[0].mxu0
      %2136 = vmatprep.mubr.f32.mxu0 0.0
      %2137 = vmatmul.mubr.f32.gmra.mrb[0].mxu0 %v2065
      %v2138 = vpop.f32.mrb[0].mxu0
      %v2139 = vadd.f32 %v2059, %v2138
      %v2140 = vpop.f32.mrb[0].mxu0
      %2141 = vdwg.mxu0
      %v2142 = vmul.f32 %v2134, 0.5
      %v2143 = vmul.f32 %v2139, 0.5
      %v2144 = vmul.f32 %v2134, 0.044715
      %v2145 = vmul.f32 %v2139, 0.044715
      %v2146 = vmul.f32 %v2144, %v2134
      %v2147 = vmul.f32 %v2145, %v2139
      %v2148 = vmul.f32 %v2146, %v2134
      %v2149 = vmul.f32 %v2147, %v2139
      %v2150 = vadd.f32 %v2134, %v2148
      %v2151 = vadd.f32 %v2139, %v2149
      %v2152 = vmul.f32 %v2150, 0.7978846
      %v2153 = vmul.f32 %v2151, 0.7978846
      %v2154 = vtanh.pop %v2152
      %v2155 = vtanh.pop %v2153
      %v2156 = vadd.f32 %v2154, 1.0
      %v2157 = vadd.f32 %v2155, 1.0
      %v2158 = vmul.f32 %v2142, %v2156
      %v2159 = vmul.f32 %v2143, %v2157
      %v2160 = vld [vmem:[%s730] sm:$0xff]
      %v2161 = vld [vmem:[%s730 + $0x8] sm:$0xff]
      %v2162 = vld [vmem:[%s730 + $0x10] sm:$0xff]
      %v2163 = vld [vmem:[%s730 + $0x18] sm:$0xff]
      %v2164 = vld [vmem:[%s730 + $0x20] sm:$0xff]
      %v2165 = vld [vmem:[%s730 + $0x28] sm:$0xff]
      %v2166 = vld [vmem:[%s730 + $0x30] sm:$0xff]
      %v2167 = vld [vmem:[%s730 + $0x38] sm:$0xff]
      %v2168 = vld [vmem:[%s730 + $0x40] sm:$0xff]
      %v2169 = vld [vmem:[%s730 + $0x48] sm:$0xff]
      %v2170 = vld [vmem:[%s730 + $0x50] sm:$0xff]
      %v2171 = vld [vmem:[%s730 + $0x58] sm:$0xff]
      %v2172 = vld [vmem:[%s730 + $0x60] sm:$0xff]
      %v2173 = vld [vmem:[%s730 + $0x68] sm:$0xff]
      %v2174 = vld [vmem:[%s730 + $0x70] sm:$0xff]
      %v2175 = vld [vmem:[%s730 + $0x78] sm:$0xff]
      %v2176 = vld [vmem:[%s733] sm:$0x1]
      %v2178 = vlaneseq
      %v2179 = vshrl.u32 %v2178, 7
      %v2180 = vsub.s32 0, %v2179
      %v2181 = vrot.slane %v2176, %v2180
      %2183 = vmatprep.subr.mxu0 0.0
      %2184 = vmatpush1.msra.mxu0 %v2160
      %2185 = vmatprep.subr.mxu0 0.0
      %2186 = vmatpush1.msra.mxu0 %v2161
      %2187 = vmatprep.subr.mxu0 0.0
      %2188 = vmatpush1.msra.mxu0 %v2162
      %2189 = vmatprep.subr.mxu0 0.0
      %2190 = vmatpush1.msra.mxu0 %v2163
      %2191 = vmatprep.subr.mxu0 0.0
      %2192 = vmatpush1.msra.mxu0 %v2164
      %2193 = vmatprep.subr.mxu0 0.0
      %2194 = vmatpush1.msra.mxu0 %v2165
      %2195 = vmatprep.subr.mxu0 0.0
      %2196 = vmatpush1.msra.mxu0 %v2166
      %2197 = vmatprep.subr.mxu0 0.0
      %2198 = vmatpush1.msra.mxu0 %v2167
      %2199 = vmatprep.subr.mxu0 0.0
      %2200 = vmatpush1.msra.mxu0 %v2168
      %2201 = vmatprep.subr.mxu0 0.0
      %2202 = vmatpush1.msra.mxu0 %v2169
      %2203 = vmatprep.subr.mxu0 0.0
      %2204 = vmatpush1.msra.mxu0 %v2170
      %2205 = vmatprep.subr.mxu0 0.0
      %2206 = vmatpush1.msra.mxu0 %v2171
      %2207 = vmatprep.subr.mxu0 0.0
      %2208 = vmatpush1.msra.mxu0 %v2172
      %2209 = vmatprep.subr.mxu0 0.0
      %2210 = vmatpush1.msra.mxu0 %v2173
      %2211 = vmatprep.subr.mxu0 0.0
      %2212 = vmatpush1.msra.mxu0 %v2174
      %2213 = vmatprep.subr.mxu0 0.0
      %2214 = vmatpush1.msra.mxu0 %v2175
      %2215 = vmatprep.subr.mxu0 0.0
      %2216 = vmatpush1.msra.mxu0 0.0
      %2217 = vmatprep.subr.mxu0 0.0
      %2218 = vmatpush1.msra.mxu0 0.0
      %2219 = vmatprep.subr.mxu0 0.0
      %2220 = vmatpush1.msra.mxu0 0.0
      %2221 = vmatprep.subr.mxu0 0.0
      %2222 = vmatpush1.msra.mxu0 0.0
      %2223 = vmatprep.subr.mxu0 0.0
      %2224 = vmatpush1.msra.mxu0 0.0
      %2225 = vmatprep.subr.mxu0 0.0
      %2226 = vmatpush1.msra.mxu0 0.0
      %2227 = vmatprep.subr.mxu0 0.0
      %2228 = vmatpush1.msra.mxu0 0.0
      %2229 = vmatprep.subr.mxu0 0.0
      %2230 = vmatpush1.msra.mxu0 0.0
      %2231 = vmatprep.subr.mxu0 0.0
      %2232 = vmatpush1.msra.mxu0 0.0
      %2233 = vmatprep.subr.mxu0 0.0
      %2234 = vmatpush1.msra.mxu0 0.0
      %2235 = vmatprep.subr.mxu0 0.0
      %2236 = vmatpush1.msra.mxu0 0.0
      %2237 = vmatprep.subr.mxu0 0.0
      %2238 = vmatpush1.msra.mxu0 0.0
      %2239 = vmatprep.subr.mxu0 0.0
      %2240 = vmatpush1.msra.mxu0 0.0
      %2241 = vmatprep.subr.mxu0 0.0
      %2242 = vmatpush1.msra.mxu0 0.0
      %2243 = vmatprep.subr.mxu0 0.0
      %2244 = vmatpush1.msra.mxu0 0.0
      %2245 = vmatprep.subr.mxu0 0.0
      %2246 = vmatpush1.msra.mxu0 0.0
      %2247 = vmatprep.mubr.f32.mxu0 0.0
      %2248 = vmatmul.mubr.f32.gmra.mrb[0].mxu0 %v2158
      %v2249 = vpop.f32.mrb[0].mxu0
      %v2250 = vadd.f32 %v2181, %v2249
      %v2251 = vpop.f32.mrb[0].mxu0
      %2252 = vmatprep.mubr.f32.mxu0 0.0
      %2253 = vmatmul.mubr.f32.gmra.mrb[0].mxu0 %v2159
      %v2254 = vpop.f32.mrb[0].mxu0
      %v2255 = vadd.f32 %v2181, %v2254
      %v2256 = vpop.f32.mrb[0].mxu0
      %2257 = vdwg.mxu0
      %v2258 = vadd.f32 %v2048, %v2250
      %v2259 = vadd.f32 %v2049, %v2255
      %v2260 = vld [vmem:[%s736] sm:$0x1]
      %v2261 = vld [vmem:[%s739] sm:$0x1]
      %v2262 = vsel %vm764, %v2258, 0.0
      %2263 = vadd.xlane.f32.xlu0 %v2262
      %v2264 = vpop.xlane.xlu0 %2263
      %v2265 = vsel %vm764, %v2259, 0.0
      %2266 = vadd.xlane.f32.xlu0 %v2265
      %v2267 = vpop.xlane.xlu0 %2266
      %v2268 = vmul.f32 %v2264, %v2013
      %v2269 = vmul.f32 %v2267, %v2013
      %v2270 = vsub.f32 %v2258, %v2268
      %v2271 = vsub.f32 %v2259, %v2269
      %v2272 = vmul.f32 %v2270, %v2270
      %v2273 = vmul.f32 %v2271, %v2271
      %v2274 = vsel %vm764, %v2272, 0.0
      %2275 = vadd.xlane.f32.xlu0 %v2274
      %v2276 = vpop.xlane.xlu0 %2275
      %v2277 = vsel %vm764, %v2273, 0.0
      %2278 = vadd.xlane.f32.xlu0 %v2277
      %v2279 = vpop.xlane.xlu0 %2278
      %v2280 = vmul.f32 %v2276, %v2013
      %v2281 = vmul.f32 %v2279, %v2013
      %v2282 = vadd.f32 %v2280, 1e-05
      %v2283 = vadd.f32 %v2281, 1e-05
      %v2284 = vrsqrt.pop %v2282
      %v2285 = vrsqrt.pop %v2283
      %v2286 = vmul.f32 %v2270, %v2284
      %v2287 = vmul.f32 %v2271, %v2285
      %v2289 = vlaneseq
      %v2290 = vshrl.u32 %v2289, 7
      %v2291 = vsub.s32 0, %v2290
      %v2292 = vrot.slane %v2260, %v2291
      %v2294 = vmul.f32 %v2286, %v2292
      %v2295 = vmul.f32 %v2287, %v2292
      %v2297 = vlaneseq
      %v2298 = vshrl.u32 %v2297, 7
      %v2299 = vsub.s32 0, %v2298
      %v2300 = vrot.slane %v2261, %v2299
      %v2302 = vadd.f32 %v2294, %v2300
      %v2303 = vadd.f32 %v2295, %v2300
      %2304 = vst.msk [vmem:[#allocation2] sm:$0xff] %vm764, %v2302
      %2305 = vst.msk [vmem:[#allocation2 + $0x8] sm:$0xff] %vm764, %v2303
      %p2306 = scmp.eq.s32.totalorder %s39, 1
      // Predicated region
      $region93: #{model_forward.1} parent=87 // pred_check
        %p2307 = pneg %p2306
      $region94: #{model_forward.1} parent=87 // pred_check_branch
        %2309 = sbr.rel (%p2307) target = $region96
      $region95: #{model_forward.1} parent=87 // pred_region
        %v2310 = vld [vmem:[%s15] sm:$0xff]
        %v2311 = vld [vmem:[%s15 + $0x8] sm:$0xff]
        %v2312 = vld [vmem:[%s15 + $0x10] sm:$0xff]
        %v2313 = vld [vmem:[%s15 + $0x18] sm:$0xff]
        %v2315 = vsel %vm764, %v2302, 0
        %v2318 = vsel %vm764, %v2303, 0
        %2320 = vmatprep.subr.mxu0 0.0
        %2321 = vmatpush1.msra.mxu0 %v2310
        %2322 = vmatprep.subr.mxu0 0.0
        %2323 = vmatpush1.msra.mxu0 %v2311
        %2324 = vmatprep.subr.mxu0 0.0
        %2325 = vmatpush1.msra.mxu0 %v2312
        %2326 = vmatprep.subr.mxu0 0.0
        %2327 = vmatpush1.msra.mxu0 %v2313
        %2328 = vmatprep.subr.mxu0 0.0
        %2329 = vmatpush1.msra.mxu0 0.0
        %2330 = vmatprep.subr.mxu0 0.0
        %2331 = vmatpush1.msra.mxu0 0.0
        %2332 = vmatprep.subr.mxu0 0.0
        %2333 = vmatpush1.msra.mxu0 0.0
        %2334 = vmatprep.subr.mxu0 0.0
        %2335 = vmatpush1.msra.mxu0 0.0
        %2336 = vmatprep.subr.mxu0 0.0
        %2337 = vmatpush1.msra.mxu0 0.0
        %2338 = vmatprep.subr.mxu0 0.0
        %2339 = vmatpush1.msra.mxu0 0.0
        %2340 = vmatprep.subr.mxu0 0.0
        %2341 = vmatpush1.msra.mxu0 0.0
        %2342 = vmatprep.subr.mxu0 0.0
        %2343 = vmatpush1.msra.mxu0 0.0
        %2344 = vmatprep.subr.mxu0 0.0
        %2345 = vmatpush1.msra.mxu0 0.0
        %2346 = vmatprep.subr.mxu0 0.0
        %2347 = vmatpush1.msra.mxu0 0.0
        %2348 = vmatprep.subr.mxu0 0.0
        %2349 = vmatpush1.msra.mxu0 0.0
        %2350 = vmatprep.subr.mxu0 0.0
        %2351 = vmatpush1.msra.mxu0 0.0
        %2352 = vmatprep.subr.mxu0 0.0
        %2353 = vmatpush1.msra.mxu0 0.0
        %2354 = vmatprep.subr.mxu0 0.0
        %2355 = vmatpush1.msra.mxu0 0.0
        %2356 = vmatprep.subr.mxu0 0.0
        %2357 = vmatpush1.msra.mxu0 0.0
        %2358 = vmatprep.subr.mxu0 0.0
        %2359 = vmatpush1.msra.mxu0 0.0
        %2360 = vmatprep.subr.mxu0 0.0
        %2361 = vmatpush1.msra.mxu0 0.0
        %2362 = vmatprep.subr.mxu0 0.0
        %2363 = vmatpush1.msra.mxu0 0.0
        %2364 = vmatprep.subr.mxu0 0.0
        %2365 = vmatpush1.msra.mxu0 0.0
        %2366 = vmatprep.subr.mxu0 0.0
        %2367 = vmatpush1.msra.mxu0 0.0
        %2368 = vmatprep.subr.mxu0 0.0
        %2369 = vmatpush1.msra.mxu0 0.0
        %2370 = vmatprep.subr.mxu0 0.0
        %2371 = vmatpush1.msra.mxu0 0.0
        %2372 = vmatprep.subr.mxu0 0.0
        %2373 = vmatpush1.msra.mxu0 0.0
        %2374 = vmatprep.subr.mxu0 0.0
        %2375 = vmatpush1.msra.mxu0 0.0
        %2376 = vmatprep.subr.mxu0 0.0
        %2377 = vmatpush1.msra.mxu0 0.0
        %2378 = vmatprep.subr.mxu0 0.0
        %2379 = vmatpush1.msra.mxu0 0.0
        %2380 = vmatprep.subr.mxu0 0.0
        %2381 = vmatpush1.msra.mxu0 0.0
        %2382 = vmatprep.subr.mxu0 0.0
        %2383 = vmatpush1.msra.mxu0 0.0
        %2384 = vmatprep.mubr.f32.mxu0 0.0
        %2385 = vmatmul.mubr.f32.gmra.mrb[0].mxu0 %v2315
        %v2386 = vpop.f32.mrb[0].mxu0
        %v2387 = vadd.f32 0.0, %v2386
        %v2388 = vpop.f32.mrb[0].mxu0
        %2389 = vmatprep.mubr.f32.mxu0 0.0
        %2390 = vmatmul.mubr.f32.gmra.mrb[0].mxu0 %v2318
        %v2391 = vpop.f32.mrb[0].mxu0
        %v2392 = vadd.f32 0.0, %v2391
        %v2393 = vpop.f32.mrb[0].mxu0
        %2394 = vdwg.mxu0
        %2395 = vst [vmem:[%s19] sm:$0xff] %v2387
        %2396 = vst [vmem:[%s19 + $0x8] sm:$0xff] %v2392
        %s2397 = sld [smem:[#allocation4]]
        %s2398 = ssub.s32 %s2397, 1
        %s2399 = scalar_lea.vmem [#allocation2], %s2398
        %v2400 = vld [vmem:[%s2399] sm:$0x1]
        %s2401 = sld [smem:[#allocation4 + $0x1]]
        %s2402 = sadd.s32 %s2401, 7
        %s2403 = scalar_lea.vmem [#allocation2], %s2402
        %v2404 = vld [vmem:[%s2403] sm:$0x1]
        %v2406 = vrot.slane %v2404, 7
        %vm2408 = vcmask 1040384
        %v2409 = vsel %vm2408, %v2400, %v2406
        %v2410 = vld [vmem:[%s16] sm:$0x1]
        %v2412 = vlaneseq
        %v2413 = vshrl.u32 %v2412, 7
        %v2414 = vsub.s32 0, %v2413
        %v2415 = vrot.slane %v2410, %v2414
        %v2417 = vmul.f32 %v2409, %v2415
        %vm2418 = vcmask 254976
        %v2419 = vsel %vm2418, %v2417, 0.0
        %2420 = vadd.xlane.f32.xlu0 %v2419
        %v2421 = vpop.xlane.xlu0 %2420
        %v2422 = vld [vmem:[#allocation5] sm:$0x1]
        %v2424 = vlaneseq
        %v2425 = vshrl.u32 %v2424, 7
        %v2426 = vsub.s32 0, %v2425
        %v2427 = vrot.slane %v2422, %v2426
        %v2429 = vadd.f32 %v2421, %v2427
        %vm2430 = vcmask 1024
        %2431 = vst.msk [vmem:[%s18] sm:$0x3] %vm2430, %v2429
      $region96: #{model_forward.1} parent=87 // pred_fallthru
        _
      // Predicated region
      $region97: #{model_forward.1} parent=87 // pred_check
        %p2432 = pneg %p469
      $region98: #{model_forward.1} parent=87 // pred_check_branch
        %2434 = sbr.rel (%p2432) target = $region100
      $region99: #{model_forward.1} parent=87 // pred_region
        _
      $region100: #{model_forward.1} parent=87 // pred_fallthru
        _
      // Predicated region
      $region101: #{model_forward.1} parent=87 // pred_check
        %p2435 = pneg %p490
      $region102: #{model_forward.1} parent=87 // pred_check_branch
        %2437 = sbr.rel (%p2435) target = $region104
      $region103: #{model_forward.1} parent=87 // pred_region
        _
      $region104: #{model_forward.1} parent=87 // pred_fallthru
        _
      // Predicated region
      $region105: #{model_forward.1} parent=87 // pred_check
        %p2438 = pneg %p469
      $region106: #{model_forward.1} parent=87 // pred_check_branch
        %2440 = sbr.rel (%p2438) target = $region108
      $region107: #{model_forward.1} parent=87 // pred_region
        _
      $region108: #{model_forward.1} parent=87 // pred_fallthru
        _
      // Predicated region
      $region109: #{model_forward.1} parent=87 // pred_check
        %p2441 = pneg %p490
      $region110: #{model_forward.1} parent=87 // pred_check_branch
        %2443 = sbr.rel (%p2441) target = $region112
      $region111: #{model_forward.1} parent=87 // pred_region
        _
      $region112: #{model_forward.1} parent=87 // pred_fallthru
        _
    $region88: #{model_forward.1} parent=5 // pred_fallthru
      _
    %p2444 = scmp.le.s32.totalorder 2, %s34
    // Predicated region
    $region113: #{model_forward.1} parent=5 // pred_check
      %p2445 = pneg %p2444
    $region114: #{model_forward.1} parent=5 // pred_check_branch
      %2447 = sbr.rel (%p2445) target = $region116
    $region115: #{model_forward.1} parent=5 // pred_region
      %s2448 = ssub.s32 %s34, 2
    $region116: #{model_forward.1} parent=5 // pred_fallthru
      _
  $region6: #{model_forward.1} parent=0 // loop_footer
    %s38 = sadd.s32 1, %s34
  $region7: #{model_forward.1} parent=0 // loop_footer_branch
    %33 = sbr.rel target = $region3
  $region8: #{model_forward.1} parent=0 // loop_exit
    _

</llo_original>
